<compile_context>
chip_gen: v7x
topology: tpu7x:2x2x1
jax: 0.10.0
libtpu: 0.0.40
codegen_flags: <defaults>
</compile_context>

<pallas_src>
import functools

import jax
import jax.numpy as jnp
from jax.experimental import pallas as pl
from jax.experimental.pallas import tpu as pltpu

K = 4                       # kernel_size
STRIDE = 2
PAD = (K - 1) // 2          # = 1 (PyTorch padding for this block)
PAD_EDGE = K - 1 - PAD      # = 2 (used by the lax reference)
EPS = 1e-5                  # InstanceNorm2d default

# 3x3 neighborhood offsets, dy-major / dx-minor; must match _pack_weights.
_TAPS = tuple((dy, dx) for dy in (-1, 0, 1) for dx in (-1, 0, 1))


def _upsample_kernel(xf_ref, w_ref, mask_ref, o_ref, patch_ref, y_ref, *,
                     hh, ww, eps):
    # xf_ref   : (BT, Cin, hfp)           zero-padded input, spatial flattened
    # w_ref    : (4*Cout, 9*Cin)          fused per-parity weight matrix
    # mask_ref : (1, BT*hf_pad) f32       1.0 on real output pixels
    # o_ref    : (BT, 4*Cout, hf_pad)     normalized outputs, spatial on lanes
    # patch_ref: (9*Cin, BT*hf_pad) f32   shared im2col scratch
    # y_ref    : (4*Cout, BT*hf_pad) f32  pre-norm conv output (never hits HBM)
    bt = xf_ref.shape[0]
    cin = xf_ref.shape[1]
    cout = o_ref.shape[1] // 4
    hf_pad = o_ref.shape[2]
    wp = ww + 2

    # ---- im2col: one shared 9-offset patch per image ----------------------
    for b in range(bt):
        for t, (dy, dx) in enumerate(_TAPS):
            start = (1 + dy) * wp + (1 + dx)
            patch_ref[t * cin:(t + 1) * cin, b * hf_pad:(b + 1) * hf_pad] = (
                xf_ref[b, :, start:start + hf_pad].astype(jnp.float32))

    # ---- transposed conv: ONE fused MXU matmul over all 4 parities --------
    # (4*Cout, 9*Cin) x (9*Cin, BT*hf_pad) -> (4*Cout, BT*hf_pad), kept in f32
    # scratch so the raw conv output never round-trips through o_ref.
    y_ref[...] = jax.lax.dot_general(
        w_ref[...].astype(jnp.float32), patch_ref[...],
        (((1,), (0,)), ((), ())),
        preferred_element_type=jnp.float32)

    # ---- InstanceNorm2d (affine=False) stats: one masked slab pass --------
    ym = y_ref[...] * mask_ref[...]          # zero junk / lane-pad columns
    ym2 = ym * ym
    inv_cnt = 1.0 / (4.0 * hh * ww)          # (2H)*(2W) real pixels per image

    for b in range(bt):
        lo = b * hf_pad
        s = jnp.sum(ym[:, lo:lo + hf_pad], axis=1, keepdims=True)    # (4C, 1)
        s2 = jnp.sum(ym2[:, lo:lo + hf_pad], axis=1, keepdims=True)  # (4C, 1)
        # fold the 4 parity row-groups into per-channel sums
        ssum = (s[0:cout] + s[cout:2 * cout]
                + s[2 * cout:3 * cout] + s[3 * cout:4 * cout])        # (C, 1)
        ssq = (s2[0:cout] + s2[cout:2 * cout]
               + s2[2 * cout:3 * cout] + s2[3 * cout:4 * cout])
        mean = ssum * inv_cnt
        var = jnp.maximum(ssq * inv_cnt - mean * mean, 0.0)  # guard cancellation
        inv = jax.lax.rsqrt(var + eps)

        # TODO(synk): nn.Dropout(0.5) is identity in eval mode; train-mode
        # masking (pltpu.prng_random_bits) is not implemented here.
        for ph in range(4):
            yb = y_ref[ph * cout:(ph + 1) * cout, lo:lo + hf_pad]
            o_ref[b, ph * cout:(ph + 1) * cout, :] = jnp.maximum(
                (yb - mean) * inv, 0.0).astype(o_ref.dtype)


def _pack_weights(w_pt):
    """ConvTranspose2d weight (Cin, Cout, 4, 4) -> (4*Cout, 9*Cin) fused matrix.

    Output parity (p, q) of the stride-2 transposed conv only touches input
    pixels at offsets (dy, dx) in {-1,0,1}^2 with kh = p + PAD - 2*dy and
    kw = q + PAD - 2*dx in range; unused offsets get zero weight.  Rows are
    parity-major ((2p+q)*Cout + c); columns are tap-major (matching _TAPS).
    """
    cin, cout = w_pt.shape[0], w_pt.shape[1]
    w9 = jnp.zeros((2, 2, cout, 3, 3, cin), w_pt.dtype)
    for p in range(2):
        for q in range(2):
            for dy in (-1, 0, 1):
                kh = p + PAD - STRIDE * dy
                if not 0 <= kh < K:
                    continue
                for dx in (-1, 0, 1):
                    kw = q + PAD - STRIDE * dx
                    if not 0 <= kw < K:
                        continue
                    w9 = w9.at[p, q, :, dy + 1, dx + 1, :].set(
                        w_pt[:, :, kh, kw].T)
    return w9.reshape(4 * cout, 9 * cin)


def _round_up(x, m):
    return (x + m - 1) // m * m


def _pick_batch_tile(n, cin, cout, hf_pad, hfp, itemsize):
    """Largest divisor of n whose per-step working set stays small in VMEM."""
    for bt in range(n, 0, -1):
        if n % bt:
            continue
        lanes = bt * hf_pad
        scratch = (9 * cin + 4 * cout) * lanes * 4
        blocks = 2 * (bt * cin * hfp + bt * 4 * cout * hf_pad) * itemsize
        if lanes <= 4096 and scratch + blocks <= 24 * (1 << 20):
            return bt
    return 1


def upsample_forward(x_nchw, w_pt):
    """x_nchw: (N, Cin, H, W) f32; w_pt: (Cin, Cout, K, K) ConvTranspose2d weight."""
    n, cin, h, w = x_nchw.shape
    cout = w_pt.shape[1]
    itemsize = jnp.dtype(x_nchw.dtype).itemsize

    wp = w + 2                       # padded row width (1 zero column each side)
    hf = h * wp                      # per-image flat spatial length (junk cols incl.)
    hf_pad = _round_up(hf, 128)      # lane-align output / patch slabs to 128
    hfp = hf_pad + 3 * wp            # padded-input flat length (covers all taps)

    bt = _pick_batch_tile(n, cin, cout, hf_pad, hfp, itemsize)

    # --- glue (plain JAX): zero-pad border, flatten spatial, pack weights ---
    xf = jnp.pad(x_nchw, ((0, 0), (0, 0), (1, 2), (1, 1))).reshape(
        n, cin, (h + 3) * wp)
    if hfp > (h + 3) * wp:
        xf = jnp.pad(xf, ((0, 0), (0, 0), (0, hfp - (h + 3) * wp)))
    w9 = _pack_weights(w_pt)

    col = jnp.arange(hf_pad, dtype=jnp.int32)
    mask1 = ((col % wp < w) & (col < hf)).astype(jnp.float32)
    mask = jnp.tile(mask1, (bt,)).reshape(1, bt * hf_pad)

    # --- explicit scoped-VMEM budget (blocks are double-buffered) ---
    need = (2 * (bt * cin * hfp * itemsize
                 + 4 * cout * 9 * cin * w9.dtype.itemsize
                 + bt * hf_pad * 4
                 + bt * 4 * cout * hf_pad * itemsize)
            + (9 * cin + 4 * cout) * bt * hf_pad * 4)
    vmem_limit = int(min(max(int(need * 1.25), 32 << 20), 64 << 20))

    kernel = functools.partial(_upsample_kernel, hh=h, ww=w, eps=EPS)

    # --- hot path: Pallas kernel, grid over batch tiles ---
    out = pl.pallas_call(
        kernel,
        out_shape=jax.ShapeDtypeStruct((n, 4 * cout, hf_pad), x_nchw.dtype),
        grid_spec=pltpu.PrefetchScalarGridSpec(
            num_scalar_prefetch=0,
            grid=(n // bt,),
            in_specs=[
                pl.BlockSpec((bt, cin, hfp), lambda i: (i, 0, 0)),
                pl.BlockSpec((4 * cout, 9 * cin), lambda i: (0, 0)),
                pl.BlockSpec((1, bt * hf_pad), lambda i: (0, 0)),
            ],
            out_specs=pl.BlockSpec((bt, 4 * cout, hf_pad), lambda i: (i, 0, 0)),
            scratch_shapes=[
                pltpu.VMEM((9 * cin, bt * hf_pad), jnp.float32),
                pltpu.VMEM((4 * cout, bt * hf_pad), jnp.float32),
            ],
        ),
        compiler_params=pltpu.CompilerParams(
            dimension_semantics=("parallel",),
            vmem_limit_bytes=vmem_limit),
    )(xf, w9, mask)

    # --- layout plumbing: (N, (2p+q)*C+c, ty*wp+tx) -> NCHW (N, C, 2H, 2W) ---
    out = out[..., :hf].reshape(n, 2, 2, cout, h, wp)[..., :w]
    out = jnp.transpose(out, (0, 3, 4, 1, 5, 2))        # (N, C, ty, p, tx, q)
    return out.reshape(n, cout, STRIDE * h, STRIDE * w)


def _reference(x_nchw, w_pt):
    """Pure-JAX reference: transposed conv via lhs-dilated conv + InstanceNorm + ReLU."""
    w_oihw = jnp.transpose(jnp.flip(w_pt, axis=(2, 3)), (1, 0, 2, 3))
    y = jax.lax.conv_general_dilated(
        x_nchw, w_oihw, window_strides=(1, 1),
        padding=[(PAD_EDGE, PAD_EDGE), (PAD_EDGE, PAD_EDGE)],
        lhs_dilation=(STRIDE, STRIDE),
        dimension_numbers=("NCHW", "OIHW", "NCHW"))
    mean = jnp.mean(y, axis=(2, 3), keepdims=True)
    var = jnp.mean((y - mean) ** 2, axis=(2, 3), keepdims=True)
    y = (y - mean) * jax.lax.rsqrt(var + EPS)
    return jnp.maximum(y, 0.0)


if __name__ == "__main__":
    key = jax.random.PRNGKey(0)
    kx, kw = jax.random.split(key)

    N, CIN, COUT, H, W = 2, 4, 8, 16, 16
    x = jax.random.normal(kx, (N, CIN, H, W), dtype=jnp.float32)
    # Deterministic ConvTranspose2d weight, shape (Cin, Cout, K, K)
    fan = COUT * K * K
    w_pt = jax.random.uniform(kw, (CIN, COUT, K, K), dtype=jnp.float32,
                              minval=-1.0, maxval=1.0) / jnp.sqrt(fan)

    out = jax.block_until_ready(upsample_forward(x, w_pt))
    ref = jax.block_until_ready(_reference(x, w_pt))

    assert out.shape == (N, COUT, STRIDE * H, STRIDE * W), out.shape
    err = float(jnp.max(jnp.abs(out - ref)))
    assert jnp.allclose(out, ref, atol=1e-4, rtol=1e-4), err

    print("KERNEL_OK")
</pallas_src>

<mosaic_0001>
module attributes {stable_mosaic.version = 11 : i64} {
  func.func @_upsample_kernel(%arg0: i32, %arg1: memref<2x4x438xf32, #tpu.memory_space<vmem>>, %arg2: memref<32x36xf32, #tpu.memory_space<vmem>>, %arg3: memref<1x768xf32, #tpu.memory_space<vmem>>, %arg4: memref<2x32x384xf32, #tpu.memory_space<vmem>>, %arg5: memref<36x768xf32, #tpu.memory_space<vmem>>, %arg6: memref<32x768xf32, #tpu.memory_space<vmem>>) attributes {dimension_semantics = [#tpu.dimension_semantics<parallel>], iteration_bounds = array<i64: 1>, scalar_prefetch = 0 : i64, scratch_operands = 2 : i64, tpu.core_type = #tpu.core_type<tc>, window_params = [{transform_indices = @transform_0, window_bounds = array<i64: 2, 4, 438>}, {pipeline_mode = #tpu.pipeline_mode<synchronous>, transform_indices = @transform_1, window_bounds = array<i64: 32, 36>}, {pipeline_mode = #tpu.pipeline_mode<synchronous>, transform_indices = @transform_2, window_bounds = array<i64: 1, 768>}, {transform_indices = @transform_3, window_bounds = array<i64: 2, 32, 384>}]} {
    %c0 = arith.constant 0 : index
    %c0_0 = arith.constant 0 : index
    %c0_1 = arith.constant 0 : index
    %0 = vector.load %arg1[%c0, %c0_0, %c0_1] : memref<2x4x438xf32, #tpu.memory_space<vmem>>, vector<1x4x384xf32>
    %1 = vector.shape_cast %0 : vector<1x4x384xf32> to vector<4x384xf32>
    %c0_2 = arith.constant 0 : index
    %c0_3 = arith.constant 0 : index
    %2 = vector.load %arg5[%c0_2, %c0_3] : memref<36x768xf32, #tpu.memory_space<vmem>>, vector<4x384xf32>
    tpu.vector_store %arg5[%c0_2, %c0_3], %1 {strides = array<i32>} : memref<36x768xf32, #tpu.memory_space<vmem>>, vector<4x384xf32>,
    %c0_4 = arith.constant 0 : index
    %c0_5 = arith.constant 0 : index
    %c1 = arith.constant 1 : index
    %3 = vector.load %arg1[%c0_4, %c0_5, %c1] : memref<2x4x438xf32, #tpu.memory_space<vmem>>, vector<1x4x384xf32>
    %4 = vector.shape_cast %3 : vector<1x4x384xf32> to vector<4x384xf32>
    %c4 = arith.constant 4 : index
    %c0_6 = arith.constant 0 : index
    %5 = vector.load %arg5[%c4, %c0_6] : memref<36x768xf32, #tpu.memory_space<vmem>>, vector<4x384xf32>
    tpu.vector_store %arg5[%c4, %c0_6], %4 {strides = array<i32>} : memref<36x768xf32, #tpu.memory_space<vmem>>, vector<4x384xf32>,
    %c0_7 = arith.constant 0 : index
    %c0_8 = arith.constant 0 : index
    %c2 = arith.constant 2 : index
    %6 = vector.load %arg1[%c0_7, %c0_8, %c2] : memref<2x4x438xf32, #tpu.memory_space<vmem>>, vector<1x4x384xf32>
    %7 = vector.shape_cast %6 : vector<1x4x384xf32> to vector<4x384xf32>
    %c8 = arith.constant 8 : index
    %c0_9 = arith.constant 0 : index
    %8 = vector.load %arg5[%c8, %c0_9] : memref<36x768xf32, #tpu.memory_space<vmem>>, vector<4x384xf32>
    tpu.vector_store %arg5[%c8, %c0_9], %7 {strides = array<i32>} : memref<36x768xf32, #tpu.memory_space<vmem>>, vector<4x384xf32>,
    %c0_10 = arith.constant 0 : index
    %c0_11 = arith.constant 0 : index
    %c18 = arith.constant 18 : index
    %9 = vector.load %arg1[%c0_10, %c0_11, %c18] : memref<2x4x438xf32, #tpu.memory_space<vmem>>, vector<1x4x384xf32>
    %10 = vector.shape_cast %9 : vector<1x4x384xf32> to vector<4x384xf32>
    %c12 = arith.constant 12 : index
    %c0_12 = arith.constant 0 : index
    %11 = vector.load %arg5[%c12, %c0_12] : memref<36x768xf32, #tpu.memory_space<vmem>>, vector<4x384xf32>
    tpu.vector_store %arg5[%c12, %c0_12], %10 {strides = array<i32>} : memref<36x768xf32, #tpu.memory_space<vmem>>, vector<4x384xf32>,
    %c0_13 = arith.constant 0 : index
    %c0_14 = arith.constant 0 : index
    %c19 = arith.constant 19 : index
    %12 = vector.load %arg1[%c0_13, %c0_14, %c19] : memref<2x4x438xf32, #tpu.memory_space<vmem>>, vector<1x4x384xf32>
    %13 = vector.shape_cast %12 : vector<1x4x384xf32> to vector<4x384xf32>
    %c16 = arith.constant 16 : index
    %c0_15 = arith.constant 0 : index
    %14 = vector.load %arg5[%c16, %c0_15] : memref<36x768xf32, #tpu.memory_space<vmem>>, vector<4x384xf32>
    tpu.vector_store %arg5[%c16, %c0_15], %13 {strides = array<i32>} : memref<36x768xf32, #tpu.memory_space<vmem>>, vector<4x384xf32>,
    %c0_16 = arith.constant 0 : index
    %c0_17 = arith.constant 0 : index
    %c20 = arith.constant 20 : index
    %15 = vector.load %arg1[%c0_16, %c0_17, %c20] : memref<2x4x438xf32, #tpu.memory_space<vmem>>, vector<1x4x384xf32>
    %16 = vector.shape_cast %15 : vector<1x4x384xf32> to vector<4x384xf32>
    %c20_18 = arith.constant 20 : index
    %c0_19 = arith.constant 0 : index
    %17 = vector.load %arg5[%c20_18, %c0_19] : memref<36x768xf32, #tpu.memory_space<vmem>>, vector<4x384xf32>
    tpu.vector_store %arg5[%c20_18, %c0_19], %16 {strides = array<i32>} : memref<36x768xf32, #tpu.memory_space<vmem>>, vector<4x384xf32>,
    %c0_20 = arith.constant 0 : index
    %c0_21 = arith.constant 0 : index
    %c36 = arith.constant 36 : index
    %18 = vector.load %arg1[%c0_20, %c0_21, %c36] : memref<2x4x438xf32, #tpu.memory_space<vmem>>, vector<1x4x384xf32>
    %19 = vector.shape_cast %18 : vector<1x4x384xf32> to vector<4x384xf32>
    %c24 = arith.constant 24 : index
    %c0_22 = arith.constant 0 : index
    %20 = vector.load %arg5[%c24, %c0_22] : memref<36x768xf32, #tpu.memory_space<vmem>>, vector<4x384xf32>
    tpu.vector_store %arg5[%c24, %c0_22], %19 {strides = array<i32>} : memref<36x768xf32, #tpu.memory_space<vmem>>, vector<4x384xf32>,
    %c0_23 = arith.constant 0 : index
    %c0_24 = arith.constant 0 : index
    %c37 = arith.constant 37 : index
    %21 = vector.load %arg1[%c0_23, %c0_24, %c37] : memref<2x4x438xf32, #tpu.memory_space<vmem>>, vector<1x4x384xf32>
    %22 = vector.shape_cast %21 : vector<1x4x384xf32> to vector<4x384xf32>
    %c28 = arith.constant 28 : index
    %c0_25 = arith.constant 0 : index
    %23 = vector.load %arg5[%c28, %c0_25] : memref<36x768xf32, #tpu.memory_space<vmem>>, vector<4x384xf32>
    tpu.vector_store %arg5[%c28, %c0_25], %22 {strides = array<i32>} : memref<36x768xf32, #tpu.memory_space<vmem>>, vector<4x384xf32>,
    %c0_26 = arith.constant 0 : index
    %c0_27 = arith.constant 0 : index
    %c38 = arith.constant 38 : index
    %24 = vector.load %arg1[%c0_26, %c0_27, %c38] : memref<2x4x438xf32, #tpu.memory_space<vmem>>, vector<1x4x384xf32>
    %25 = vector.shape_cast %24 : vector<1x4x384xf32> to vector<4x384xf32>
    %c32 = arith.constant 32 : index
    %c0_28 = arith.constant 0 : index
    %26 = vector.load %arg5[%c32, %c0_28] : memref<36x768xf32, #tpu.memory_space<vmem>>, vector<4x384xf32>
    tpu.vector_store %arg5[%c32, %c0_28], %25 {strides = array<i32>} : memref<36x768xf32, #tpu.memory_space<vmem>>, vector<4x384xf32>,
    %c1_29 = arith.constant 1 : index
    %c0_30 = arith.constant 0 : index
    %c0_31 = arith.constant 0 : index
    %27 = vector.load %arg1[%c1_29, %c0_30, %c0_31] : memref<2x4x438xf32, #tpu.memory_space<vmem>>, vector<1x4x384xf32>
    %28 = vector.shape_cast %27 : vector<1x4x384xf32> to vector<4x384xf32>
    %c0_32 = arith.constant 0 : index
    %c384 = arith.constant 384 : index
    %29 = vector.load %arg5[%c0_32, %c384] : memref<36x768xf32, #tpu.memory_space<vmem>>, vector<4x384xf32>
    tpu.vector_store %arg5[%c0_32, %c384], %28 {strides = array<i32>} : memref<36x768xf32, #tpu.memory_space<vmem>>, vector<4x384xf32>,
    %c1_33 = arith.constant 1 : index
    %c0_34 = arith.constant 0 : index
    %c1_35 = arith.constant 1 : index
    %30 = vector.load %arg1[%c1_33, %c0_34, %c1_35] : memref<2x4x438xf32, #tpu.memory_space<vmem>>, vector<1x4x384xf32>
    %31 = vector.shape_cast %30 : vector<1x4x384xf32> to vector<4x384xf32>
    %c4_36 = arith.constant 4 : index
    %c384_37 = arith.constant 384 : index
    %32 = vector.load %arg5[%c4_36, %c384_37] : memref<36x768xf32, #tpu.memory_space<vmem>>, vector<4x384xf32>
    tpu.vector_store %arg5[%c4_36, %c384_37], %31 {strides = array<i32>} : memref<36x768xf32, #tpu.memory_space<vmem>>, vector<4x384xf32>,
    %c1_38 = arith.constant 1 : index
    %c0_39 = arith.constant 0 : index
    %c2_40 = arith.constant 2 : index
    %33 = vector.load %arg1[%c1_38, %c0_39, %c2_40] : memref<2x4x438xf32, #tpu.memory_space<vmem>>, vector<1x4x384xf32>
    %34 = vector.shape_cast %33 : vector<1x4x384xf32> to vector<4x384xf32>
    %c8_41 = arith.constant 8 : index
    %c384_42 = arith.constant 384 : index
    %35 = vector.load %arg5[%c8_41, %c384_42] : memref<36x768xf32, #tpu.memory_space<vmem>>, vector<4x384xf32>
    tpu.vector_store %arg5[%c8_41, %c384_42], %34 {strides = array<i32>} : memref<36x768xf32, #tpu.memory_space<vmem>>, vector<4x384xf32>,
    %c1_43 = arith.constant 1 : index
    %c0_44 = arith.constant 0 : index
    %c18_45 = arith.constant 18 : index
    %36 = vector.load %arg1[%c1_43, %c0_44, %c18_45] : memref<2x4x438xf32, #tpu.memory_space<vmem>>, vector<1x4x384xf32>
    %37 = vector.shape_cast %36 : vector<1x4x384xf32> to vector<4x384xf32>
    %c12_46 = arith.constant 12 : index
    %c384_47 = arith.constant 384 : index
    %38 = vector.load %arg5[%c12_46, %c384_47] : memref<36x768xf32, #tpu.memory_space<vmem>>, vector<4x384xf32>
    tpu.vector_store %arg5[%c12_46, %c384_47], %37 {strides = array<i32>} : memref<36x768xf32, #tpu.memory_space<vmem>>, vector<4x384xf32>,
    %c1_48 = arith.constant 1 : index
    %c0_49 = arith.constant 0 : index
    %c19_50 = arith.constant 19 : index
    %39 = vector.load %arg1[%c1_48, %c0_49, %c19_50] : memref<2x4x438xf32, #tpu.memory_space<vmem>>, vector<1x4x384xf32>
    %40 = vector.shape_cast %39 : vector<1x4x384xf32> to vector<4x384xf32>
    %c16_51 = arith.constant 16 : index
    %c384_52 = arith.constant 384 : index
    %41 = vector.load %arg5[%c16_51, %c384_52] : memref<36x768xf32, #tpu.memory_space<vmem>>, vector<4x384xf32>
    tpu.vector_store %arg5[%c16_51, %c384_52], %40 {strides = array<i32>} : memref<36x768xf32, #tpu.memory_space<vmem>>, vector<4x384xf32>,
    %c1_53 = arith.constant 1 : index
    %c0_54 = arith.constant 0 : index
    %c20_55 = arith.constant 20 : index
    %42 = vector.load %arg1[%c1_53, %c0_54, %c20_55] : memref<2x4x438xf32, #tpu.memory_space<vmem>>, vector<1x4x384xf32>
    %43 = vector.shape_cast %42 : vector<1x4x384xf32> to vector<4x384xf32>
    %c20_56 = arith.constant 20 : index
    %c384_57 = arith.constant 384 : index
    %44 = vector.load %arg5[%c20_56, %c384_57] : memref<36x768xf32, #tpu.memory_space<vmem>>, vector<4x384xf32>
    tpu.vector_store %arg5[%c20_56, %c384_57], %43 {strides = array<i32>} : memref<36x768xf32, #tpu.memory_space<vmem>>, vector<4x384xf32>,
    %c1_58 = arith.constant 1 : index
    %c0_59 = arith.constant 0 : index
    %c36_60 = arith.constant 36 : index
    %45 = vector.load %arg1[%c1_58, %c0_59, %c36_60] : memref<2x4x438xf32, #tpu.memory_space<vmem>>, vector<1x4x384xf32>
    %46 = vector.shape_cast %45 : vector<1x4x384xf32> to vector<4x384xf32>
    %c24_61 = arith.constant 24 : index
    %c384_62 = arith.constant 384 : index
    %47 = vector.load %arg5[%c24_61, %c384_62] : memref<36x768xf32, #tpu.memory_space<vmem>>, vector<4x384xf32>
    tpu.vector_store %arg5[%c24_61, %c384_62], %46 {strides = array<i32>} : memref<36x768xf32, #tpu.memory_space<vmem>>, vector<4x384xf32>,
    %c1_63 = arith.constant 1 : index
    %c0_64 = arith.constant 0 : index
    %c37_65 = arith.constant 37 : index
    %48 = vector.load %arg1[%c1_63, %c0_64, %c37_65] : memref<2x4x438xf32, #tpu.memory_space<vmem>>, vector<1x4x384xf32>
    %49 = vector.shape_cast %48 : vector<1x4x384xf32> to vector<4x384xf32>
    %c28_66 = arith.constant 28 : index
    %c384_67 = arith.constant 384 : index
    %50 = vector.load %arg5[%c28_66, %c384_67] : memref<36x768xf32, #tpu.memory_space<vmem>>, vector<4x384xf32>
    tpu.vector_store %arg5[%c28_66, %c384_67], %49 {strides = array<i32>} : memref<36x768xf32, #tpu.memory_space<vmem>>, vector<4x384xf32>,
    %c1_68 = arith.constant 1 : index
    %c0_69 = arith.constant 0 : index
    %c38_70 = arith.constant 38 : index
    %51 = vector.load %arg1[%c1_68, %c0_69, %c38_70] : memref<2x4x438xf32, #tpu.memory_space<vmem>>, vector<1x4x384xf32>
    %52 = vector.shape_cast %51 : vector<1x4x384xf32> to vector<4x384xf32>
    %c32_71 = arith.constant 32 : index
    %c384_72 = arith.constant 384 : index
    %53 = vector.load %arg5[%c32_71, %c384_72] : memref<36x768xf32, #tpu.memory_space<vmem>>, vector<4x384xf32>
    tpu.vector_store %arg5[%c32_71, %c384_72], %52 {strides = array<i32>} : memref<36x768xf32, #tpu.memory_space<vmem>>, vector<4x384xf32>,
    %c0_73 = arith.constant 0 : index
    %c0_74 = arith.constant 0 : index
    %54 = vector.load %arg2[%c0_73, %c0_74] : memref<32x36xf32, #tpu.memory_space<vmem>>, vector<32x36xf32>
    %c0_75 = arith.constant 0 : index
    %c0_76 = arith.constant 0 : index
    %55 = vector.load %arg5[%c0_75, %c0_76] : memref<36x768xf32, #tpu.memory_space<vmem>>, vector<36x768xf32>
    %cst = arith.constant dense<0.000000e+00> : vector<32x768xf32>
    %56 = tpu.matmul %54, %55, %cst {dimension_numbers = #tpu.dot_dimension_numbers<[1], [0], [0], [1], [0, 0, 1, 1], [], []>} : vector<32x36xf32>, vector<36x768xf32>, vector<32x768xf32> -> vector<32x768xf32>
    %c0_77 = arith.constant 0 : index
    %c0_78 = arith.constant 0 : index
    %57 = vector.load %arg6[%c0_77, %c0_78] : memref<32x768xf32, #tpu.memory_space<vmem>>, vector<32x768xf32>
    tpu.vector_store %arg6[%c0_77, %c0_78], %56 {strides = array<i32>} : memref<32x768xf32, #tpu.memory_space<vmem>>, vector<32x768xf32>,
    %c0_79 = arith.constant 0 : index
    %c0_80 = arith.constant 0 : index
    %58 = vector.load %arg6[%c0_79, %c0_80] : memref<32x768xf32, #tpu.memory_space<vmem>>, vector<32x768xf32>
    %c0_81 = arith.constant 0 : index
    %c0_82 = arith.constant 0 : index
    %59 = vector.load %arg3[%c0_81, %c0_82] : memref<1x768xf32, #tpu.memory_space<vmem>>, vector<1x768xf32>
    %60 = vector.broadcast %59 : vector<1x768xf32> to vector<32x768xf32>
    %61 = arith.mulf %58, %60 : vector<32x768xf32>
    %62 = arith.mulf %61, %61 : vector<32x768xf32>
    %63 = vector.extract_strided_slice %61 {offsets = [0, 0], sizes = [32, 384], strides = [1, 1]} : vector<32x768xf32> to vector<32x384xf32>
    %cst_83 = arith.constant dense<0.000000e+00> : vector<32xf32>
    %64 = vector.multi_reduction <add>, %63, %cst_83 [1] : vector<32x384xf32> to vector<32xf32>
    %65 = vector.shape_cast %64 : vector<32xf32> to vector<32x1xf32>
    %66 = vector.extract_strided_slice %62 {offsets = [0, 0], sizes = [32, 384], strides = [1, 1]} : vector<32x768xf32> to vector<32x384xf32>
    %cst_84 = arith.constant dense<0.000000e+00> : vector<32xf32>
    %67 = vector.multi_reduction <add>, %66, %cst_84 [1] : vector<32x384xf32> to vector<32xf32>
    %68 = vector.shape_cast %67 : vector<32xf32> to vector<32x1xf32>
    %69 = vector.extract_strided_slice %65 {offsets = [0, 0], sizes = [8, 1], strides = [1, 1]} : vector<32x1xf32> to vector<8x1xf32>
    %70 = vector.extract_strided_slice %65 {offsets = [8, 0], sizes = [8, 1], strides = [1, 1]} : vector<32x1xf32> to vector<8x1xf32>
    %71 = arith.addf %69, %70 : vector<8x1xf32>
    %72 = vector.extract_strided_slice %65 {offsets = [16, 0], sizes = [8, 1], strides = [1, 1]} : vector<32x1xf32> to vector<8x1xf32>
    %73 = arith.addf %71, %72 : vector<8x1xf32>
    %74 = vector.extract_strided_slice %65 {offsets = [24, 0], sizes = [8, 1], strides = [1, 1]} : vector<32x1xf32> to vector<8x1xf32>
    %75 = arith.addf %73, %74 : vector<8x1xf32>
    %76 = vector.extract_strided_slice %68 {offsets = [0, 0], sizes = [8, 1], strides = [1, 1]} : vector<32x1xf32> to vector<8x1xf32>
    %77 = vector.extract_strided_slice %68 {offsets = [8, 0], sizes = [8, 1], strides = [1, 1]} : vector<32x1xf32> to vector<8x1xf32>
    %78 = arith.addf %76, %77 : vector<8x1xf32>
    %79 = vector.extract_strided_slice %68 {offsets = [16, 0], sizes = [8, 1], strides = [1, 1]} : vector<32x1xf32> to vector<8x1xf32>
    %80 = arith.addf %78, %79 : vector<8x1xf32>
    %81 = vector.extract_strided_slice %68 {offsets = [24, 0], sizes = [8, 1], strides = [1, 1]} : vector<32x1xf32> to vector<8x1xf32>
    %82 = arith.addf %80, %81 : vector<8x1xf32>
    %cst_85 = arith.constant 9.765625E-4 : f32
    %83 = vector.broadcast %cst_85 : f32 to vector<8x1xf32>
    %84 = arith.mulf %75, %83 : vector<8x1xf32>
    %cst_86 = arith.constant 9.765625E-4 : f32
    %85 = vector.broadcast %cst_86 : f32 to vector<8x1xf32>
    %86 = arith.mulf %82, %85 : vector<8x1xf32>
    %87 = arith.mulf %84, %84 : vector<8x1xf32>
    %88 = arith.subf %86, %87 : vector<8x1xf32>
    %cst_87 = arith.constant 0.000000e+00 : f32
    %89 = vector.broadcast %cst_87 : f32 to vector<8x1xf32>
    %90 = arith.maximumf %88, %89 : vector<8x1xf32>
    %cst_88 = arith.constant 9.99999974E-6 : f32
    %91 = vector.broadcast %cst_88 : f32 to vector<8x1xf32>
    %92 = arith.addf %90, %91 : vector<8x1xf32>
    %93 = math.rsqrt %92 : vector<8x1xf32>
    %c0_89 = arith.constant 0 : index
    %c0_90 = arith.constant 0 : index
    %94 = vector.load %arg6[%c0_89, %c0_90] : memref<32x768xf32, #tpu.memory_space<vmem>>, vector<8x384xf32>
    %95 = vector.broadcast %84 : vector<8x1xf32> to vector<8x384xf32>
    %96 = arith.subf %94, %95 : vector<8x384xf32>
    %97 = vector.broadcast %93 : vector<8x1xf32> to vector<8x384xf32>
    %98 = arith.mulf %96, %97 : vector<8x384xf32>
    %cst_91 = arith.constant 0.000000e+00 : f32
    %99 = vector.broadcast %cst_91 : f32 to vector<8x384xf32>
    %100 = arith.maximumf %98, %99 : vector<8x384xf32>
    %c0_92 = arith.constant 0 : index
    %c0_93 = arith.constant 0 : index
    %c0_94 = arith.constant 0 : index
    %101 = vector.load %arg4[%c0_92, %c0_93, %c0_94] : memref<2x32x384xf32, #tpu.memory_space<vmem>>, vector<1x8x384xf32>
    %102 = vector.shape_cast %101 : vector<1x8x384xf32> to vector<8x384xf32>
    %103 = vector.shape_cast %100 : vector<8x384xf32> to vector<1x8x384xf32>
    tpu.vector_store %arg4[%c0_92, %c0_93, %c0_94], %103 {strides = array<i32>} : memref<2x32x384xf32, #tpu.memory_space<vmem>>, vector<1x8x384xf32>,
    %c8_95 = arith.constant 8 : index
    %c0_96 = arith.constant 0 : index
    %104 = vector.load %arg6[%c8_95, %c0_96] : memref<32x768xf32, #tpu.memory_space<vmem>>, vector<8x384xf32>
    %105 = vector.broadcast %84 : vector<8x1xf32> to vector<8x384xf32>
    %106 = arith.subf %104, %105 : vector<8x384xf32>
    %107 = vector.broadcast %93 : vector<8x1xf32> to vector<8x384xf32>
    %108 = arith.mulf %106, %107 : vector<8x384xf32>
    %cst_97 = arith.constant 0.000000e+00 : f32
    %109 = vector.broadcast %cst_97 : f32 to vector<8x384xf32>
    %110 = arith.maximumf %108, %109 : vector<8x384xf32>
    %c0_98 = arith.constant 0 : index
    %c8_99 = arith.constant 8 : index
    %c0_100 = arith.constant 0 : index
    %111 = vector.load %arg4[%c0_98, %c8_99, %c0_100] : memref<2x32x384xf32, #tpu.memory_space<vmem>>, vector<1x8x384xf32>
    %112 = vector.shape_cast %111 : vector<1x8x384xf32> to vector<8x384xf32>
    %113 = vector.shape_cast %110 : vector<8x384xf32> to vector<1x8x384xf32>
    tpu.vector_store %arg4[%c0_98, %c8_99, %c0_100], %113 {strides = array<i32>} : memref<2x32x384xf32, #tpu.memory_space<vmem>>, vector<1x8x384xf32>,
    %c16_101 = arith.constant 16 : index
    %c0_102 = arith.constant 0 : index
    %114 = vector.load %arg6[%c16_101, %c0_102] : memref<32x768xf32, #tpu.memory_space<vmem>>, vector<8x384xf32>
    %115 = vector.broadcast %84 : vector<8x1xf32> to vector<8x384xf32>
    %116 = arith.subf %114, %115 : vector<8x384xf32>
    %117 = vector.broadcast %93 : vector<8x1xf32> to vector<8x384xf32>
    %118 = arith.mulf %116, %117 : vector<8x384xf32>
    %cst_103 = arith.constant 0.000000e+00 : f32
    %119 = vector.broadcast %cst_103 : f32 to vector<8x384xf32>
    %120 = arith.maximumf %118, %119 : vector<8x384xf32>
    %c0_104 = arith.constant 0 : index
    %c16_105 = arith.constant 16 : index
    %c0_106 = arith.constant 0 : index
    %121 = vector.load %arg4[%c0_104, %c16_105, %c0_106] : memref<2x32x384xf32, #tpu.memory_space<vmem>>, vector<1x8x384xf32>
    %122 = vector.shape_cast %121 : vector<1x8x384xf32> to vector<8x384xf32>
    %123 = vector.shape_cast %120 : vector<8x384xf32> to vector<1x8x384xf32>
    tpu.vector_store %arg4[%c0_104, %c16_105, %c0_106], %123 {strides = array<i32>} : memref<2x32x384xf32, #tpu.memory_space<vmem>>, vector<1x8x384xf32>,
    %c24_107 = arith.constant 24 : index
    %c0_108 = arith.constant 0 : index
    %124 = vector.load %arg6[%c24_107, %c0_108] : memref<32x768xf32, #tpu.memory_space<vmem>>, vector<8x384xf32>
    %125 = vector.broadcast %84 : vector<8x1xf32> to vector<8x384xf32>
    %126 = arith.subf %124, %125 : vector<8x384xf32>
    %127 = vector.broadcast %93 : vector<8x1xf32> to vector<8x384xf32>
    %128 = arith.mulf %126, %127 : vector<8x384xf32>
    %cst_109 = arith.constant 0.000000e+00 : f32
    %129 = vector.broadcast %cst_109 : f32 to vector<8x384xf32>
    %130 = arith.maximumf %128, %129 : vector<8x384xf32>
    %c0_110 = arith.constant 0 : index
    %c24_111 = arith.constant 24 : index
    %c0_112 = arith.constant 0 : index
    %131 = vector.load %arg4[%c0_110, %c24_111, %c0_112] : memref<2x32x384xf32, #tpu.memory_space<vmem>>, vector<1x8x384xf32>
    %132 = vector.shape_cast %131 : vector<1x8x384xf32> to vector<8x384xf32>
    %133 = vector.shape_cast %130 : vector<8x384xf32> to vector<1x8x384xf32>
    tpu.vector_store %arg4[%c0_110, %c24_111, %c0_112], %133 {strides = array<i32>} : memref<2x32x384xf32, #tpu.memory_space<vmem>>, vector<1x8x384xf32>,
    %134 = vector.extract_strided_slice %61 {offsets = [0, 384], sizes = [32, 384], strides = [1, 1]} : vector<32x768xf32> to vector<32x384xf32>
    %cst_113 = arith.constant dense<0.000000e+00> : vector<32xf32>
    %135 = vector.multi_reduction <add>, %134, %cst_113 [1] : vector<32x384xf32> to vector<32xf32>
    %136 = vector.shape_cast %135 : vector<32xf32> to vector<32x1xf32>
    %137 = vector.extract_strided_slice %62 {offsets = [0, 384], sizes = [32, 384], strides = [1, 1]} : vector<32x768xf32> to vector<32x384xf32>
    %cst_114 = arith.constant dense<0.000000e+00> : vector<32xf32>
    %138 = vector.multi_reduction <add>, %137, %cst_114 [1] : vector<32x384xf32> to vector<32xf32>
    %139 = vector.shape_cast %138 : vector<32xf32> to vector<32x1xf32>
    %140 = vector.extract_strided_slice %136 {offsets = [0, 0], sizes = [8, 1], strides = [1, 1]} : vector<32x1xf32> to vector<8x1xf32>
    %141 = vector.extract_strided_slice %136 {offsets = [8, 0], sizes = [8, 1], strides = [1, 1]} : vector<32x1xf32> to vector<8x1xf32>
    %142 = arith.addf %140, %141 : vector<8x1xf32>
    %143 = vector.extract_strided_slice %136 {offsets = [16, 0], sizes = [8, 1], strides = [1, 1]} : vector<32x1xf32> to vector<8x1xf32>
    %144 = arith.addf %142, %143 : vector<8x1xf32>
    %145 = vector.extract_strided_slice %136 {offsets = [24, 0], sizes = [8, 1], strides = [1, 1]} : vector<32x1xf32> to vector<8x1xf32>
    %146 = arith.addf %144, %145 : vector<8x1xf32>
    %147 = vector.extract_strided_slice %139 {offsets = [0, 0], sizes = [8, 1], strides = [1, 1]} : vector<32x1xf32> to vector<8x1xf32>
    %148 = vector.extract_strided_slice %139 {offsets = [8, 0], sizes = [8, 1], strides = [1, 1]} : vector<32x1xf32> to vector<8x1xf32>
    %149 = arith.addf %147, %148 : vector<8x1xf32>
    %150 = vector.extract_strided_slice %139 {offsets = [16, 0], sizes = [8, 1], strides = [1, 1]} : vector<32x1xf32> to vector<8x1xf32>
    %151 = arith.addf %149, %150 : vector<8x1xf32>
    %152 = vector.extract_strided_slice %139 {offsets = [24, 0], sizes = [8, 1], strides = [1, 1]} : vector<32x1xf32> to vector<8x1xf32>
    %153 = arith.addf %151, %152 : vector<8x1xf32>
    %cst_115 = arith.constant 9.765625E-4 : f32
    %154 = vector.broadcast %cst_115 : f32 to vector<8x1xf32>
    %155 = arith.mulf %146, %154 : vector<8x1xf32>
    %cst_116 = arith.constant 9.765625E-4 : f32
    %156 = vector.broadcast %cst_116 : f32 to vector<8x1xf32>
    %157 = arith.mulf %153, %156 : vector<8x1xf32>
    %158 = arith.mulf %155, %155 : vector<8x1xf32>
    %159 = arith.subf %157, %158 : vector<8x1xf32>
    %cst_117 = arith.constant 0.000000e+00 : f32
    %160 = vector.broadcast %cst_117 : f32 to vector<8x1xf32>
    %161 = arith.maximumf %159, %160 : vector<8x1xf32>
    %cst_118 = arith.constant 9.99999974E-6 : f32
    %162 = vector.broadcast %cst_118 : f32 to vector<8x1xf32>
    %163 = arith.addf %161, %162 : vector<8x1xf32>
    %164 = math.rsqrt %163 : vector<8x1xf32>
    %c0_119 = arith.constant 0 : index
    %c384_120 = arith.constant 384 : index
    %165 = vector.load %arg6[%c0_119, %c384_120] : memref<32x768xf32, #tpu.memory_space<vmem>>, vector<8x384xf32>
    %166 = vector.broadcast %155 : vector<8x1xf32> to vector<8x384xf32>
    %167 = arith.subf %165, %166 : vector<8x384xf32>
    %168 = vector.broadcast %164 : vector<8x1xf32> to vector<8x384xf32>
    %169 = arith.mulf %167, %168 : vector<8x384xf32>
    %cst_121 = arith.constant 0.000000e+00 : f32
    %170 = vector.broadcast %cst_121 : f32 to vector<8x384xf32>
    %171 = arith.maximumf %169, %170 : vector<8x384xf32>
    %c1_122 = arith.constant 1 : index
    %c0_123 = arith.constant 0 : index
    %c0_124 = arith.constant 0 : index
    %172 = vector.load %arg4[%c1_122, %c0_123, %c0_124] : memref<2x32x384xf32, #tpu.memory_space<vmem>>, vector<1x8x384xf32>
    %173 = vector.shape_cast %172 : vector<1x8x384xf32> to vector<8x384xf32>
    %174 = vector.shape_cast %171 : vector<8x384xf32> to vector<1x8x384xf32>
    tpu.vector_store %arg4[%c1_122, %c0_123, %c0_124], %174 {strides = array<i32>} : memref<2x32x384xf32, #tpu.memory_space<vmem>>, vector<1x8x384xf32>,
    %c8_125 = arith.constant 8 : index
    %c384_126 = arith.constant 384 : index
    %175 = vector.load %arg6[%c8_125, %c384_126] : memref<32x768xf32, #tpu.memory_space<vmem>>, vector<8x384xf32>
    %176 = vector.broadcast %155 : vector<8x1xf32> to vector<8x384xf32>
    %177 = arith.subf %175, %176 : vector<8x384xf32>
    %178 = vector.broadcast %164 : vector<8x1xf32> to vector<8x384xf32>
    %179 = arith.mulf %177, %178 : vector<8x384xf32>
    %cst_127 = arith.constant 0.000000e+00 : f32
    %180 = vector.broadcast %cst_127 : f32 to vector<8x384xf32>
    %181 = arith.maximumf %179, %180 : vector<8x384xf32>
    %c1_128 = arith.constant 1 : index
    %c8_129 = arith.constant 8 : index
    %c0_130 = arith.constant 0 : index
    %182 = vector.load %arg4[%c1_128, %c8_129, %c0_130] : memref<2x32x384xf32, #tpu.memory_space<vmem>>, vector<1x8x384xf32>
    %183 = vector.shape_cast %182 : vector<1x8x384xf32> to vector<8x384xf32>
    %184 = vector.shape_cast %181 : vector<8x384xf32> to vector<1x8x384xf32>
    tpu.vector_store %arg4[%c1_128, %c8_129, %c0_130], %184 {strides = array<i32>} : memref<2x32x384xf32, #tpu.memory_space<vmem>>, vector<1x8x384xf32>,
    %c16_131 = arith.constant 16 : index
    %c384_132 = arith.constant 384 : index
    %185 = vector.load %arg6[%c16_131, %c384_132] : memref<32x768xf32, #tpu.memory_space<vmem>>, vector<8x384xf32>
    %186 = vector.broadcast %155 : vector<8x1xf32> to vector<8x384xf32>
    %187 = arith.subf %185, %186 : vector<8x384xf32>
    %188 = vector.broadcast %164 : vector<8x1xf32> to vector<8x384xf32>
    %189 = arith.mulf %187, %188 : vector<8x384xf32>
    %cst_133 = arith.constant 0.000000e+00 : f32
    %190 = vector.broadcast %cst_133 : f32 to vector<8x384xf32>
    %191 = arith.maximumf %189, %190 : vector<8x384xf32>
    %c1_134 = arith.constant 1 : index
    %c16_135 = arith.constant 16 : index
    %c0_136 = arith.constant 0 : index
    %192 = vector.load %arg4[%c1_134, %c16_135, %c0_136] : memref<2x32x384xf32, #tpu.memory_space<vmem>>, vector<1x8x384xf32>
    %193 = vector.shape_cast %192 : vector<1x8x384xf32> to vector<8x384xf32>
    %194 = vector.shape_cast %191 : vector<8x384xf32> to vector<1x8x384xf32>
    tpu.vector_store %arg4[%c1_134, %c16_135, %c0_136], %194 {strides = array<i32>} : memref<2x32x384xf32, #tpu.memory_space<vmem>>, vector<1x8x384xf32>,
    %c24_137 = arith.constant 24 : index
    %c384_138 = arith.constant 384 : index
    %195 = vector.load %arg6[%c24_137, %c384_138] : memref<32x768xf32, #tpu.memory_space<vmem>>, vector<8x384xf32>
    %196 = vector.broadcast %155 : vector<8x1xf32> to vector<8x384xf32>
    %197 = arith.subf %195, %196 : vector<8x384xf32>
    %198 = vector.broadcast %164 : vector<8x1xf32> to vector<8x384xf32>
    %199 = arith.mulf %197, %198 : vector<8x384xf32>
    %cst_139 = arith.constant 0.000000e+00 : f32
    %200 = vector.broadcast %cst_139 : f32 to vector<8x384xf32>
    %201 = arith.maximumf %199, %200 : vector<8x384xf32>
    %c1_140 = arith.constant 1 : index
    %c24_141 = arith.constant 24 : index
    %c0_142 = arith.constant 0 : index
    %202 = vector.load %arg4[%c1_140, %c24_141, %c0_142] : memref<2x32x384xf32, #tpu.memory_space<vmem>>, vector<1x8x384xf32>
    %203 = vector.shape_cast %202 : vector<1x8x384xf32> to vector<8x384xf32>
    %204 = vector.shape_cast %201 : vector<8x384xf32> to vector<1x8x384xf32>
    tpu.vector_store %arg4[%c1_140, %c24_141, %c0_142], %204 {strides = array<i32>} : memref<2x32x384xf32, #tpu.memory_space<vmem>>, vector<1x8x384xf32>,
    return
  }
  func.func @transform_0(%arg0: i32) -> (i32, i32, i32) {
    %c0_i32 = arith.constant 0 : i32
    %c0_i32_0 = arith.constant 0 : i32
    %c0_i32_1 = arith.constant 0 : i32
    return %arg0, %c0_i32, %c0_i32_0 : i32, i32, i32
  }
  func.func @transform_1(%arg0: i32) -> (i32, i32) {
    %c0_i32 = arith.constant 0 : i32
    %c0_i32_0 = arith.constant 0 : i32
    %c0_i32_1 = arith.constant 0 : i32
    return %c0_i32, %c0_i32_0 : i32, i32
  }
  func.func @transform_2(%arg0: i32) -> (i32, i32) {
    %c0_i32 = arith.constant 0 : i32
    %c0_i32_0 = arith.constant 0 : i32
    %c0_i32_1 = arith.constant 0 : i32
    return %c0_i32, %c0_i32_0 : i32, i32
  }
  func.func @transform_3(%arg0: i32) -> (i32, i32, i32) {
    %c0_i32 = arith.constant 0 : i32
    %c0_i32_0 = arith.constant 0 : i32
    %c0_i32_1 = arith.constant 0 : i32
    return %arg0, %c0_i32, %c0_i32_0 : i32, i32, i32
  }
}

</mosaic_0001>

<llo_original>
// kernel: tpu_custom_call.1
$region0: #{tpu_custom_call.1}
  #allocation0 [shape = 'u32[]', space=smem, size = 0x4, offset = 0x4, fixed_abs, tag = 'smem constant byte address 0x4 - core index']
  #allocation1 [shape = 'u32[144,128]{1,0:T(1,128)}', space=vmem, size = 0x12000, scoped, tag = 'internal scratch']
  #allocation2 [shape = 'f32[36,768]{1,0:T(8,128)}', space=vmem, size = 0x1e000, scoped, tag = 'scratch operand']
  #allocation3 [shape = 'f32[32,768]{1,0:T(8,128)}', space=vmem, size = 0x18000, scoped, tag = 'scratch operand']
  %s0 = inlined_call_operand.hbm [shape: f32[2,4,438], index: 0, kind: input, shape index: {}]
  %s1 = inlined_call_operand.hbm [shape: f32[32,36], index: 1, kind: input, shape index: {}]
  %s2 = inlined_call_operand.vmem [shape: f32[1,768], index: 2, kind: input, shape index: {}]
  %s3 = inlined_call_operand.hbm [shape: f32[2,32,384], index: 3, kind: output, shape index: {}]
  %s4 = sld [smem:[#allocation0]]
  $region30: #{tpu_custom_call.1} parent=0
    _
  %s6 = ssub.s32 1, %s4
  %s7 = scalar_select 0, %s6, %s4
  $region1: #{tpu_custom_call.1} parent=0
    #allocation4 [shape = 'u8[16384]{0}', space=vmem, size = 0x4000, scoped, tag = 'input window, operand 0, single buffered']
    #allocation5 [shape = 's32[1]{0}', space=sflag, size = 0x4, scoped, tag = 'scoped memory for tpu_custom_call.1']
    #allocation6 [shape = 's32[1]{0}', space=sflag, size = 0x4, scoped, tag = 'scoped memory for tpu_custom_call.1']
    #allocation7 [shape = 'u8[16384]{0}', space=vmem, size = 0x4000, scoped, tag = 'input window, operand 1, single buffered']
    #allocation8 [shape = 's32[1]{0}', space=sflag, size = 0x4, scoped, tag = 'scoped memory for tpu_custom_call.1']
    #allocation9 [shape = 'u8[98304]{0}', space=vmem, size = 0x18000, scoped, tag = 'output window, operand 0, single buffered']
    %8 = vsyncpa [#allocation5], 0
    %9 = vsyncpa [#allocation8], 0
    %10 = vsyncpa [#allocation6], 0
    // Predicated region
    $region2: #{tpu_custom_call.1} parent=1 // pred_check
      _
    $region3: #{tpu_custom_call.1} parent=1 // pred_check_branch
      %12 = sbr.rel (0) target = $region5
    $region4: #{tpu_custom_call.1} parent=1 // pred_region
      %s14 = ssub.s32 512, 512
      %15 = vsyncadd [#allocation5], %s14
      %s16 = sshll.u32 [#allocation4], 4
      %s17 = int_to_ptr.vmem [resolvable:$true] %s16
      %22 = dma.hbm_to_vmem [thread:$0]  %s0, 512, %s17, [#allocation5], 256, 256, 16
    $region5: #{tpu_custom_call.1} parent=1 // pred_fallthru
      _
    // Predicated region
    $region6: #{tpu_custom_call.1} parent=1 // pred_check
      _
    $region7: #{tpu_custom_call.1} parent=1 // pred_check_branch
      %24 = sbr.rel (0) target = $region9
    $region8: #{tpu_custom_call.1} parent=1 // pred_region
      %s26 = ssub.s32 512, 512
      %27 = vsyncadd [#allocation8], %s26
      %s28 = sshll.u32 [#allocation7], 4
      %s29 = int_to_ptr.vmem [resolvable:$true] %s28
      %34 = dma.hbm_to_vmem [thread:$0]  %s1, 512, %s29, [#allocation8], 128, 128, 8
    $region9: #{tpu_custom_call.1} parent=1 // pred_fallthru
      _
    // Predicated region
    $region10: #{tpu_custom_call.1} parent=1 // pred_check
      _
    $region11: #{tpu_custom_call.1} parent=1 // pred_check_branch
      %36 = sbr.rel (0) target = $region13
    $region12: #{tpu_custom_call.1} parent=1 // pred_region
      _
    $region13: #{tpu_custom_call.1} parent=1 // pred_fallthru
      _
    // Predicated region
    $region14: #{tpu_custom_call.1} parent=1 // pred_check
      _
    $region15: #{tpu_custom_call.1} parent=1 // pred_check_branch
      %38 = sbr.rel (0) target = $region17
    $region16: #{tpu_custom_call.1} parent=1 // pred_region
      %39 = dma.done [#allocation5], 512
    $region17: #{tpu_custom_call.1} parent=1 // pred_fallthru
      _
    // Predicated region
    $region18: #{tpu_custom_call.1} parent=1 // pred_check
      _
    $region19: #{tpu_custom_call.1} parent=1 // pred_check_branch
      %41 = sbr.rel (0) target = $region21
    $region20: #{tpu_custom_call.1} parent=1 // pred_region
      %42 = dma.done [#allocation8], 512
    $region21: #{tpu_custom_call.1} parent=1 // pred_fallthru
      _
    %v43 = vld [vmem:[#allocation4] sm:$0xff]
    %v44 = vld [vmem:[#allocation4 + $0x8] sm:$0xf]
    %v46 = vcombine.high %v43, %v43
    %48 = vst [vmem:[#allocation2] sm:$0xf] %v43
    %49 = vst [vmem:[#allocation2 + $0x8] sm:$0xf] %v46
    %50 = vst [vmem:[#allocation2 + $0x10] sm:$0xf] %v44
    %v51 = vld [vmem:[#allocation4] sm:$0xff]
    %v52 = vld [vmem:[#allocation4 + $0x8] sm:$0xff]
    %v55 = vcombine.low %v51, %v51
    %v56 = vcombine.low %v52, %v52
    %57 = vrot.lane.b32.xlu0 %v55, 127
    %v58 = vpop.permute.xlu0 %57
    %59 = vrot.lane.b32.xlu0 %v51, 127
    %v60 = vpop.permute.xlu0 %59
    %61 = vrot.lane.b32.xlu0 %v56, 127
    %v62 = vpop.permute.xlu0 %61
    %63 = vrot.lane.b32.xlu0 %v52, 127
    %v64 = vpop.permute.xlu0 %63
    %vm65 = vcmask 1039360
    %v66 = vsel %vm65, %v58, %v60
    %v67 = vsel %vm65, %v60, %v62
    %v68 = vsel %vm65, %v62, %v64
    %72 = vst [vmem:[#allocation2] sm:$0xf0] %v66
    %73 = vst [vmem:[#allocation2 + $0x8] sm:$0xf0] %v67
    %74 = vst [vmem:[#allocation2 + $0x10] sm:$0xf0] %v68
    %v75 = vld [vmem:[#allocation4] sm:$0xff]
    %v76 = vld [vmem:[#allocation4 + $0x8] sm:$0xff]
    %v79 = vcombine.high %v75, %v75
    %v80 = vcombine.high %v76, %v76
    %81 = vrot.lane.b32.xlu0 %v75, 126
    %v82 = vpop.permute.xlu0 %81
    %83 = vrot.lane.b32.xlu0 %v79, 126
    %v84 = vpop.permute.xlu0 %83
    %85 = vrot.lane.b32.xlu0 %v76, 126
    %v86 = vpop.permute.xlu0 %85
    %87 = vrot.lane.b32.xlu0 %v80, 126
    %v88 = vpop.permute.xlu0 %87
    %vm89 = vcmask 1031168
    %v90 = vsel %vm89, %v82, %v84
    %v91 = vsel %vm89, %v84, %v86
    %v92 = vsel %vm89, %v86, %v88
    %96 = vst [vmem:[#allocation2 + $0x30] sm:$0xf] %v90
    %97 = vst [vmem:[#allocation2 + $0x38] sm:$0xf] %v91
    %98 = vst [vmem:[#allocation2 + $0x40] sm:$0xf] %v92
    %v99 = vld [vmem:[#allocation4] sm:$0xff]
    %v100 = vld [vmem:[#allocation4 + $0x8] sm:$0xff]
    %v103 = vcombine.low %v99, %v99
    %v104 = vcombine.low %v100, %v100
    %105 = vrot.lane.b32.xlu0 %v103, 110
    %v106 = vpop.permute.xlu0 %105
    %107 = vrot.lane.b32.xlu0 %v99, 110
    %v108 = vpop.permute.xlu0 %107
    %109 = vrot.lane.b32.xlu0 %v104, 110
    %v110 = vpop.permute.xlu0 %109
    %111 = vrot.lane.b32.xlu0 %v100, 110
    %v112 = vpop.permute.xlu0 %111
    %vm113 = vcmask 900096
    %v114 = vsel %vm113, %v106, %v108
    %v115 = vsel %vm113, %v108, %v110
    %v116 = vsel %vm113, %v110, %v112
    %120 = vst [vmem:[#allocation2 + $0x30] sm:$0xf0] %v114
    %121 = vst [vmem:[#allocation2 + $0x38] sm:$0xf0] %v115
    %122 = vst [vmem:[#allocation2 + $0x40] sm:$0xf0] %v116
    %v123 = vld [vmem:[#allocation4] sm:$0xff]
    %v124 = vld [vmem:[#allocation4 + $0x8] sm:$0xff]
    %v127 = vcombine.high %v123, %v123
    %v128 = vcombine.high %v124, %v124
    %129 = vrot.lane.b32.xlu0 %v123, 109
    %v130 = vpop.permute.xlu0 %129
    %131 = vrot.lane.b32.xlu0 %v127, 109
    %v132 = vpop.permute.xlu0 %131
    %133 = vrot.lane.b32.xlu0 %v124, 109
    %v134 = vpop.permute.xlu0 %133
    %135 = vrot.lane.b32.xlu0 %v128, 109
    %v136 = vpop.permute.xlu0 %135
    %vm137 = vcmask 891904
    %v138 = vsel %vm137, %v130, %v132
    %v139 = vsel %vm137, %v132, %v134
    %v140 = vsel %vm137, %v134, %v136
    %144 = vst [vmem:[#allocation2 + $0x60] sm:$0xf] %v138
    %145 = vst [vmem:[#allocation2 + $0x68] sm:$0xf] %v139
    %146 = vst [vmem:[#allocation2 + $0x70] sm:$0xf] %v140
    %v147 = vld [vmem:[#allocation4] sm:$0xff]
    %v148 = vld [vmem:[#allocation4 + $0x8] sm:$0xff]
    %v151 = vcombine.low %v147, %v147
    %v152 = vcombine.low %v148, %v148
    %153 = vrot.lane.b32.xlu0 %v151, 108
    %v154 = vpop.permute.xlu0 %153
    %155 = vrot.lane.b32.xlu0 %v147, 108
    %v156 = vpop.permute.xlu0 %155
    %157 = vrot.lane.b32.xlu0 %v152, 108
    %v158 = vpop.permute.xlu0 %157
    %159 = vrot.lane.b32.xlu0 %v148, 108
    %v160 = vpop.permute.xlu0 %159
    %vm161 = vcmask 883712
    %v162 = vsel %vm161, %v154, %v156
    %v163 = vsel %vm161, %v156, %v158
    %v164 = vsel %vm161, %v158, %v160
    %168 = vst [vmem:[#allocation2 + $0x60] sm:$0xf0] %v162
    %169 = vst [vmem:[#allocation2 + $0x68] sm:$0xf0] %v163
    %170 = vst [vmem:[#allocation2 + $0x70] sm:$0xf0] %v164
    %v171 = vld [vmem:[#allocation4] sm:$0xff]
    %v172 = vld [vmem:[#allocation4 + $0x8] sm:$0xff]
    %v175 = vcombine.high %v171, %v171
    %v176 = vcombine.high %v172, %v172
    %177 = vrot.lane.b32.xlu0 %v171, 92
    %v178 = vpop.permute.xlu0 %177
    %179 = vrot.lane.b32.xlu0 %v175, 92
    %v180 = vpop.permute.xlu0 %179
    %181 = vrot.lane.b32.xlu0 %v172, 92
    %v182 = vpop.permute.xlu0 %181
    %183 = vrot.lane.b32.xlu0 %v176, 92
    %v184 = vpop.permute.xlu0 %183
    %vm185 = vcmask 752640
    %v186 = vsel %vm185, %v178, %v180
    %v187 = vsel %vm185, %v180, %v182
    %v188 = vsel %vm185, %v182, %v184
    %192 = vst [vmem:[#allocation2 + $0x90] sm:$0xf] %v186
    %193 = vst [vmem:[#allocation2 + $0x98] sm:$0xf] %v187
    %194 = vst [vmem:[#allocation2 + $0xa0] sm:$0xf] %v188
    %v195 = vld [vmem:[#allocation4] sm:$0xff]
    %v196 = vld [vmem:[#allocation4 + $0x8] sm:$0xff]
    %v199 = vcombine.low %v195, %v195
    %v200 = vcombine.low %v196, %v196
    %201 = vrot.lane.b32.xlu0 %v199, 91
    %v202 = vpop.permute.xlu0 %201
    %203 = vrot.lane.b32.xlu0 %v195, 91
    %v204 = vpop.permute.xlu0 %203
    %205 = vrot.lane.b32.xlu0 %v200, 91
    %v206 = vpop.permute.xlu0 %205
    %207 = vrot.lane.b32.xlu0 %v196, 91
    %v208 = vpop.permute.xlu0 %207
    %vm209 = vcmask 744448
    %v210 = vsel %vm209, %v202, %v204
    %v211 = vsel %vm209, %v204, %v206
    %v212 = vsel %vm209, %v206, %v208
    %216 = vst [vmem:[#allocation2 + $0x90] sm:$0xf0] %v210
    %217 = vst [vmem:[#allocation2 + $0x98] sm:$0xf0] %v211
    %218 = vst [vmem:[#allocation2 + $0xa0] sm:$0xf0] %v212
    %v219 = vld [vmem:[#allocation4] sm:$0xff]
    %v220 = vld [vmem:[#allocation4 + $0x8] sm:$0xff]
    %v223 = vcombine.high %v219, %v219
    %v224 = vcombine.high %v220, %v220
    %225 = vrot.lane.b32.xlu0 %v219, 90
    %v226 = vpop.permute.xlu0 %225
    %227 = vrot.lane.b32.xlu0 %v223, 90
    %v228 = vpop.permute.xlu0 %227
    %229 = vrot.lane.b32.xlu0 %v220, 90
    %v230 = vpop.permute.xlu0 %229
    %231 = vrot.lane.b32.xlu0 %v224, 90
    %v232 = vpop.permute.xlu0 %231
    %vm233 = vcmask 736256
    %v234 = vsel %vm233, %v226, %v228
    %v235 = vsel %vm233, %v228, %v230
    %v236 = vsel %vm233, %v230, %v232
    %240 = vst [vmem:[#allocation2 + $0xc0] sm:$0xf] %v234
    %241 = vst [vmem:[#allocation2 + $0xc8] sm:$0xf] %v235
    %242 = vst [vmem:[#allocation2 + $0xd0] sm:$0xf] %v236
    %s243 = scalar_lea.vmem [#allocation4], 16
    %v244 = vld [vmem:[%s243] sm:$0xff]
    %v245 = vld [vmem:[%s243 + $0x8] sm:$0xf]
    %v247 = vcombine.high %v244, %v244
    %249 = vst [vmem:[#allocation2 + $0x18] sm:$0xf] %v244
    %250 = vst [vmem:[#allocation2 + $0x20] sm:$0xf] %v247
    %251 = vst [vmem:[#allocation2 + $0x28] sm:$0xf] %v245
    %v252 = vld [vmem:[%s243] sm:$0xff]
    %v253 = vld [vmem:[%s243 + $0x8] sm:$0xff]
    %v256 = vcombine.low %v252, %v252
    %v257 = vcombine.low %v253, %v253
    %258 = vrot.lane.b32.xlu0 %v256, 127
    %v259 = vpop.permute.xlu0 %258
    %260 = vrot.lane.b32.xlu0 %v252, 127
    %v261 = vpop.permute.xlu0 %260
    %262 = vrot.lane.b32.xlu0 %v257, 127
    %v263 = vpop.permute.xlu0 %262
    %264 = vrot.lane.b32.xlu0 %v253, 127
    %v265 = vpop.permute.xlu0 %264
    %v266 = vsel %vm65, %v259, %v261
    %v267 = vsel %vm65, %v261, %v263
    %v268 = vsel %vm65, %v263, %v265
    %272 = vst [vmem:[#allocation2 + $0x18] sm:$0xf0] %v266
    %273 = vst [vmem:[#allocation2 + $0x20] sm:$0xf0] %v267
    %274 = vst [vmem:[#allocation2 + $0x28] sm:$0xf0] %v268
    %v275 = vld [vmem:[%s243] sm:$0xff]
    %v276 = vld [vmem:[%s243 + $0x8] sm:$0xff]
    %v279 = vcombine.high %v275, %v275
    %v280 = vcombine.high %v276, %v276
    %281 = vrot.lane.b32.xlu0 %v275, 126
    %v282 = vpop.permute.xlu0 %281
    %283 = vrot.lane.b32.xlu0 %v279, 126
    %v284 = vpop.permute.xlu0 %283
    %285 = vrot.lane.b32.xlu0 %v276, 126
    %v286 = vpop.permute.xlu0 %285
    %287 = vrot.lane.b32.xlu0 %v280, 126
    %v288 = vpop.permute.xlu0 %287
    %v289 = vsel %vm89, %v282, %v284
    %v290 = vsel %vm89, %v284, %v286
    %v291 = vsel %vm89, %v286, %v288
    %295 = vst [vmem:[#allocation2 + $0x48] sm:$0xf] %v289
    %296 = vst [vmem:[#allocation2 + $0x50] sm:$0xf] %v290
    %297 = vst [vmem:[#allocation2 + $0x58] sm:$0xf] %v291
    %v298 = vld [vmem:[%s243] sm:$0xff]
    %v299 = vld [vmem:[%s243 + $0x8] sm:$0xff]
    %v302 = vcombine.low %v298, %v298
    %v303 = vcombine.low %v299, %v299
    %304 = vrot.lane.b32.xlu0 %v302, 110
    %v305 = vpop.permute.xlu0 %304
    %306 = vrot.lane.b32.xlu0 %v298, 110
    %v307 = vpop.permute.xlu0 %306
    %308 = vrot.lane.b32.xlu0 %v303, 110
    %v309 = vpop.permute.xlu0 %308
    %310 = vrot.lane.b32.xlu0 %v299, 110
    %v311 = vpop.permute.xlu0 %310
    %v312 = vsel %vm113, %v305, %v307
    %v313 = vsel %vm113, %v307, %v309
    %v314 = vsel %vm113, %v309, %v311
    %318 = vst [vmem:[#allocation2 + $0x48] sm:$0xf0] %v312
    %319 = vst [vmem:[#allocation2 + $0x50] sm:$0xf0] %v313
    %320 = vst [vmem:[#allocation2 + $0x58] sm:$0xf0] %v314
    %v321 = vld [vmem:[%s243] sm:$0xff]
    %v322 = vld [vmem:[%s243 + $0x8] sm:$0xff]
    %v325 = vcombine.high %v321, %v321
    %v326 = vcombine.high %v322, %v322
    %327 = vrot.lane.b32.xlu0 %v321, 109
    %v328 = vpop.permute.xlu0 %327
    %329 = vrot.lane.b32.xlu0 %v325, 109
    %v330 = vpop.permute.xlu0 %329
    %331 = vrot.lane.b32.xlu0 %v322, 109
    %v332 = vpop.permute.xlu0 %331
    %333 = vrot.lane.b32.xlu0 %v326, 109
    %v334 = vpop.permute.xlu0 %333
    %v335 = vsel %vm137, %v328, %v330
    %v336 = vsel %vm137, %v330, %v332
    %v337 = vsel %vm137, %v332, %v334
    %341 = vst [vmem:[#allocation2 + $0x78] sm:$0xf] %v335
    %342 = vst [vmem:[#allocation2 + $0x80] sm:$0xf] %v336
    %343 = vst [vmem:[#allocation2 + $0x88] sm:$0xf] %v337
    %v344 = vld [vmem:[%s243] sm:$0xff]
    %v345 = vld [vmem:[%s243 + $0x8] sm:$0xff]
    %v348 = vcombine.low %v344, %v344
    %v349 = vcombine.low %v345, %v345
    %350 = vrot.lane.b32.xlu0 %v348, 108
    %v351 = vpop.permute.xlu0 %350
    %352 = vrot.lane.b32.xlu0 %v344, 108
    %v353 = vpop.permute.xlu0 %352
    %354 = vrot.lane.b32.xlu0 %v349, 108
    %v355 = vpop.permute.xlu0 %354
    %356 = vrot.lane.b32.xlu0 %v345, 108
    %v357 = vpop.permute.xlu0 %356
    %v358 = vsel %vm161, %v351, %v353
    %v359 = vsel %vm161, %v353, %v355
    %v360 = vsel %vm161, %v355, %v357
    %364 = vst [vmem:[#allocation2 + $0x78] sm:$0xf0] %v358
    %365 = vst [vmem:[#allocation2 + $0x80] sm:$0xf0] %v359
    %366 = vst [vmem:[#allocation2 + $0x88] sm:$0xf0] %v360
    %v367 = vld [vmem:[%s243] sm:$0xff]
    %v368 = vld [vmem:[%s243 + $0x8] sm:$0xff]
    %v371 = vcombine.high %v367, %v367
    %v372 = vcombine.high %v368, %v368
    %373 = vrot.lane.b32.xlu0 %v367, 92
    %v374 = vpop.permute.xlu0 %373
    %375 = vrot.lane.b32.xlu0 %v371, 92
    %v376 = vpop.permute.xlu0 %375
    %377 = vrot.lane.b32.xlu0 %v368, 92
    %v378 = vpop.permute.xlu0 %377
    %379 = vrot.lane.b32.xlu0 %v372, 92
    %v380 = vpop.permute.xlu0 %379
    %v381 = vsel %vm185, %v374, %v376
    %v382 = vsel %vm185, %v376, %v378
    %v383 = vsel %vm185, %v378, %v380
    %387 = vst [vmem:[#allocation2 + $0xa8] sm:$0xf] %v381
    %388 = vst [vmem:[#allocation2 + $0xb0] sm:$0xf] %v382
    %389 = vst [vmem:[#allocation2 + $0xb8] sm:$0xf] %v383
    %v390 = vld [vmem:[%s243] sm:$0xff]
    %v391 = vld [vmem:[%s243 + $0x8] sm:$0xff]
    %v394 = vcombine.low %v390, %v390
    %v395 = vcombine.low %v391, %v391
    %396 = vrot.lane.b32.xlu0 %v394, 91
    %v397 = vpop.permute.xlu0 %396
    %398 = vrot.lane.b32.xlu0 %v390, 91
    %v399 = vpop.permute.xlu0 %398
    %400 = vrot.lane.b32.xlu0 %v395, 91
    %v401 = vpop.permute.xlu0 %400
    %402 = vrot.lane.b32.xlu0 %v391, 91
    %v403 = vpop.permute.xlu0 %402
    %v404 = vsel %vm209, %v397, %v399
    %v405 = vsel %vm209, %v399, %v401
    %v406 = vsel %vm209, %v401, %v403
    %410 = vst [vmem:[#allocation2 + $0xa8] sm:$0xf0] %v404
    %411 = vst [vmem:[#allocation2 + $0xb0] sm:$0xf0] %v405
    %412 = vst [vmem:[#allocation2 + $0xb8] sm:$0xf0] %v406
    %v413 = vld [vmem:[%s243] sm:$0xff]
    %v414 = vld [vmem:[%s243 + $0x8] sm:$0xff]
    %v417 = vcombine.high %v413, %v413
    %v418 = vcombine.high %v414, %v414
    %419 = vrot.lane.b32.xlu0 %v413, 90
    %v420 = vpop.permute.xlu0 %419
    %421 = vrot.lane.b32.xlu0 %v417, 90
    %v422 = vpop.permute.xlu0 %421
    %423 = vrot.lane.b32.xlu0 %v414, 90
    %v424 = vpop.permute.xlu0 %423
    %425 = vrot.lane.b32.xlu0 %v418, 90
    %v426 = vpop.permute.xlu0 %425
    %v427 = vsel %vm233, %v420, %v422
    %v428 = vsel %vm233, %v422, %v424
    %v429 = vsel %vm233, %v424, %v426
    %433 = vst [vmem:[#allocation2 + $0xd8] sm:$0xf] %v427
    %434 = vst [vmem:[#allocation2 + $0xe0] sm:$0xf] %v428
    %435 = vst [vmem:[#allocation2 + $0xe8] sm:$0xf] %v429
    %v436 = vld [vmem:[#allocation7] sm:$0xff]
    %v437 = vld [vmem:[#allocation7 + $0x8] sm:$0xff]
    %v438 = vld [vmem:[#allocation7 + $0x10] sm:$0xff]
    %v439 = vld [vmem:[#allocation7 + $0x18] sm:$0xff]
    %v440 = vld [vmem:[#allocation2] sm:$0xff]
    %v441 = vld [vmem:[#allocation2 + $0x8] sm:$0xff]
    %v442 = vld [vmem:[#allocation2 + $0x10] sm:$0xff]
    %v443 = vld [vmem:[#allocation2 + $0x18] sm:$0xff]
    %v444 = vld [vmem:[#allocation2 + $0x20] sm:$0xff]
    %v445 = vld [vmem:[#allocation2 + $0x28] sm:$0xff]
    %v446 = vld [vmem:[#allocation2 + $0x30] sm:$0xff]
    %v447 = vld [vmem:[#allocation2 + $0x38] sm:$0xff]
    %v448 = vld [vmem:[#allocation2 + $0x40] sm:$0xff]
    %v449 = vld [vmem:[#allocation2 + $0x48] sm:$0xff]
    %v450 = vld [vmem:[#allocation2 + $0x50] sm:$0xff]
    %v451 = vld [vmem:[#allocation2 + $0x58] sm:$0xff]
    %v452 = vld [vmem:[#allocation2 + $0x60] sm:$0xff]
    %v453 = vld [vmem:[#allocation2 + $0x68] sm:$0xff]
    %v454 = vld [vmem:[#allocation2 + $0x70] sm:$0xff]
    %v455 = vld [vmem:[#allocation2 + $0x78] sm:$0xff]
    %v456 = vld [vmem:[#allocation2 + $0x80] sm:$0xff]
    %v457 = vld [vmem:[#allocation2 + $0x88] sm:$0xff]
    %v458 = vld [vmem:[#allocation2 + $0x90] sm:$0xff]
    %v459 = vld [vmem:[#allocation2 + $0x98] sm:$0xff]
    %v460 = vld [vmem:[#allocation2 + $0xa0] sm:$0xff]
    %v461 = vld [vmem:[#allocation2 + $0xa8] sm:$0xff]
    %v462 = vld [vmem:[#allocation2 + $0xb0] sm:$0xff]
    %v463 = vld [vmem:[#allocation2 + $0xb8] sm:$0xff]
    %v464 = vld [vmem:[#allocation2 + $0xc0] sm:$0xf]
    %v465 = vld [vmem:[#allocation2 + $0xc8] sm:$0xf]
    %v466 = vld [vmem:[#allocation2 + $0xd0] sm:$0xf]
    %v467 = vld [vmem:[#allocation2 + $0xd8] sm:$0xf]
    %v468 = vld [vmem:[#allocation2 + $0xe0] sm:$0xf]
    %v469 = vld [vmem:[#allocation2 + $0xe8] sm:$0xf]
    %vm470 = vcmask 293888
    %v472 = vsel %vm470, %v436, 0
    %v475 = vsel %vm470, %v437, 0
    %v478 = vsel %vm470, %v438, 0
    %v481 = vsel %vm470, %v439, 0
    %vm483 = vcmask 1043456
    %v485 = vsel %vm483, %v464, 0
    %v488 = vsel %vm483, %v465, 0
    %v491 = vsel %vm483, %v466, 0
    %v494 = vsel %vm483, %v467, 0
    %v497 = vsel %vm483, %v468, 0
    %v500 = vsel %vm483, %v469, 0
    %502 = vmatprep.subr.mxu0 %v441
    %503 = vmatpush1.msra.mxu0 %v440
    %504 = vmatprep.subr.mxu0 %v447
    %505 = vmatpush1.msra.mxu0 %v446
    %506 = vmatprep.subr.mxu0 %v453
    %507 = vmatpush1.msra.mxu0 %v452
    %508 = vmatprep.subr.mxu0 %v459
    %509 = vmatpush1.msra.mxu0 %v458
    %510 = vmatprep.subr.mxu0 %v488
    %511 = vmatpush1.msra.mxu0 %v485
    %512 = vmatprep.subr.mxu0 0.0
    %513 = vmatpush1.msra.mxu0 0.0
    %514 = vmatprep.subr.mxu0 0.0
    %515 = vmatpush1.msra.mxu0 0.0
    %516 = vmatprep.subr.mxu0 0.0
    %517 = vmatpush1.msra.mxu0 0.0
    %518 = vmatprep.subr.mxu0 0.0
    %519 = vmatpush1.msra.mxu0 0.0
    %520 = vmatprep.subr.mxu0 0.0
    %521 = vmatpush1.msra.mxu0 0.0
    %522 = vmatprep.subr.mxu0 0.0
    %523 = vmatpush1.msra.mxu0 0.0
    %524 = vmatprep.subr.mxu0 0.0
    %525 = vmatpush1.msra.mxu0 0.0
    %526 = vmatprep.subr.mxu0 0.0
    %527 = vmatpush1.msra.mxu0 0.0
    %528 = vmatprep.subr.mxu0 0.0
    %529 = vmatpush1.msra.mxu0 0.0
    %530 = vmatprep.subr.mxu0 0.0
    %531 = vmatpush1.msra.mxu0 0.0
    %532 = vmatprep.subr.mxu0 0.0
    %533 = vmatpush1.msra.mxu0 0.0
    %534 = vmatprep.subr.mxu0 0.0
    %535 = vmatpush1.msra.mxu0 0.0
    %536 = vmatprep.subr.mxu0 0.0
    %537 = vmatpush1.msra.mxu0 0.0
    %538 = vmatprep.subr.mxu0 0.0
    %539 = vmatpush1.msra.mxu0 0.0
    %540 = vmatprep.subr.mxu0 0.0
    %541 = vmatpush1.msra.mxu0 0.0
    %542 = vmatprep.subr.mxu0 0.0
    %543 = vmatpush1.msra.mxu0 0.0
    %544 = vmatprep.subr.mxu0 0.0
    %545 = vmatpush1.msra.mxu0 0.0
    %546 = vmatprep.subr.mxu0 0.0
    %547 = vmatpush1.msra.mxu0 0.0
    %548 = vmatprep.subr.mxu0 0.0
    %549 = vmatpush1.msra.mxu0 0.0
    %550 = vmatprep.subr.mxu0 0.0
    %551 = vmatpush1.msra.mxu0 0.0
    %552 = vmatprep.subr.mxu0 0.0
    %553 = vmatpush1.msra.mxu0 0.0
    %554 = vmatprep.subr.mxu0 0.0
    %555 = vmatpush1.msra.mxu0 0.0
    %556 = vmatprep.subr.mxu0 0.0
    %557 = vmatpush1.msra.mxu0 0.0
    %558 = vmatprep.subr.mxu0 0.0
    %559 = vmatpush1.msra.mxu0 0.0
    %560 = vmatprep.subr.mxu0 0.0
    %561 = vmatpush1.msra.mxu0 0.0
    %562 = vmatprep.subr.mxu0 0.0
    %563 = vmatpush1.msra.mxu0 0.0
    %564 = vmatprep.subr.mxu0 0.0
    %565 = vmatpush1.msra.mxu0 0.0
    %566 = vmatprep.mubr.f32.mxu0 0.0
    %567 = vmatmul.mubr.f32.gmra.mrb[0].mxu0 %v472
    %v568 = vpop.f32.mrb[0].mxu0
    %v569 = vadd.f32 0.0, %v568
    %v570 = vpop.f32.mrb[0].mxu0
    %v571 = vadd.f32 0.0, %v570
    %572 = vmatprep.mubr.f32.mxu0 0.0
    %573 = vmatmul.mubr.f32.gmra.mrb[0].mxu0 %v475
    %v574 = vpop.f32.mrb[0].mxu0
    %v575 = vadd.f32 0.0, %v574
    %v576 = vpop.f32.mrb[0].mxu0
    %v577 = vadd.f32 0.0, %v576
    %578 = vmatprep.mubr.f32.mxu0 0.0
    %579 = vmatmul.mubr.f32.gmra.mrb[0].mxu0 %v478
    %v580 = vpop.f32.mrb[0].mxu0
    %v581 = vadd.f32 0.0, %v580
    %v582 = vpop.f32.mrb[0].mxu0
    %v583 = vadd.f32 0.0, %v582
    %584 = vmatprep.mubr.f32.mxu0 0.0
    %585 = vmatmul.mubr.f32.gmra.mrb[0].mxu0 %v481
    %v586 = vpop.f32.mrb[0].mxu0
    %v587 = vadd.f32 0.0, %v586
    %v588 = vpop.f32.mrb[0].mxu0
    %v589 = vadd.f32 0.0, %v588
    %590 = vdwg.mxu0
    %591 = vmatprep.subr.mxu0 %v443
    %592 = vmatpush1.msra.mxu0 %v442
    %593 = vmatprep.subr.mxu0 %v449
    %594 = vmatpush1.msra.mxu0 %v448
    %595 = vmatprep.subr.mxu0 %v455
    %596 = vmatpush1.msra.mxu0 %v454
    %597 = vmatprep.subr.mxu0 %v461
    %598 = vmatpush1.msra.mxu0 %v460
    %599 = vmatprep.subr.mxu0 %v494
    %600 = vmatpush1.msra.mxu0 %v491
    %601 = vmatprep.subr.mxu0 0.0
    %602 = vmatpush1.msra.mxu0 0.0
    %603 = vmatprep.subr.mxu0 0.0
    %604 = vmatpush1.msra.mxu0 0.0
    %605 = vmatprep.subr.mxu0 0.0
    %606 = vmatpush1.msra.mxu0 0.0
    %607 = vmatprep.subr.mxu0 0.0
    %608 = vmatpush1.msra.mxu0 0.0
    %609 = vmatprep.subr.mxu0 0.0
    %610 = vmatpush1.msra.mxu0 0.0
    %611 = vmatprep.subr.mxu0 0.0
    %612 = vmatpush1.msra.mxu0 0.0
    %613 = vmatprep.subr.mxu0 0.0
    %614 = vmatpush1.msra.mxu0 0.0
    %615 = vmatprep.subr.mxu0 0.0
    %616 = vmatpush1.msra.mxu0 0.0
    %617 = vmatprep.subr.mxu0 0.0
    %618 = vmatpush1.msra.mxu0 0.0
    %619 = vmatprep.subr.mxu0 0.0
    %620 = vmatpush1.msra.mxu0 0.0
    %621 = vmatprep.subr.mxu0 0.0
    %622 = vmatpush1.msra.mxu0 0.0
    %623 = vmatprep.subr.mxu0 0.0
    %624 = vmatpush1.msra.mxu0 0.0
    %625 = vmatprep.subr.mxu0 0.0
    %626 = vmatpush1.msra.mxu0 0.0
    %627 = vmatprep.subr.mxu0 0.0
    %628 = vmatpush1.msra.mxu0 0.0
    %629 = vmatprep.subr.mxu0 0.0
    %630 = vmatpush1.msra.mxu0 0.0
    %631 = vmatprep.subr.mxu0 0.0
    %632 = vmatpush1.msra.mxu0 0.0
    %633 = vmatprep.subr.mxu0 0.0
    %634 = vmatpush1.msra.mxu0 0.0
    %635 = vmatprep.subr.mxu0 0.0
    %636 = vmatpush1.msra.mxu0 0.0
    %637 = vmatprep.subr.mxu0 0.0
    %638 = vmatpush1.msra.mxu0 0.0
    %639 = vmatprep.subr.mxu0 0.0
    %640 = vmatpush1.msra.mxu0 0.0
    %641 = vmatprep.subr.mxu0 0.0
    %642 = vmatpush1.msra.mxu0 0.0
    %643 = vmatprep.subr.mxu0 0.0
    %644 = vmatpush1.msra.mxu0 0.0
    %645 = vmatprep.subr.mxu0 0.0
    %646 = vmatpush1.msra.mxu0 0.0
    %647 = vmatprep.subr.mxu0 0.0
    %648 = vmatpush1.msra.mxu0 0.0
    %649 = vmatprep.subr.mxu0 0.0
    %650 = vmatpush1.msra.mxu0 0.0
    %651 = vmatprep.subr.mxu0 0.0
    %652 = vmatpush1.msra.mxu0 0.0
    %653 = vmatprep.subr.mxu0 0.0
    %654 = vmatpush1.msra.mxu0 0.0
    %655 = vmatprep.mubr.f32.mxu0 0.0
    %656 = vmatmul.mubr.f32.gmra.mrb[0].mxu0 %v472
    %v657 = vpop.f32.mrb[0].mxu0
    %v658 = vadd.f32 0.0, %v657
    %v659 = vpop.f32.mrb[0].mxu0
    %v660 = vadd.f32 0.0, %v659
    %661 = vmatprep.mubr.f32.mxu0 0.0
    %662 = vmatmul.mubr.f32.gmra.mrb[0].mxu0 %v475
    %v663 = vpop.f32.mrb[0].mxu0
    %v664 = vadd.f32 0.0, %v663
    %v665 = vpop.f32.mrb[0].mxu0
    %v666 = vadd.f32 0.0, %v665
    %667 = vmatprep.mubr.f32.mxu0 0.0
    %668 = vmatmul.mubr.f32.gmra.mrb[0].mxu0 %v478
    %v669 = vpop.f32.mrb[0].mxu0
    %v670 = vadd.f32 0.0, %v669
    %v671 = vpop.f32.mrb[0].mxu0
    %v672 = vadd.f32 0.0, %v671
    %673 = vmatprep.mubr.f32.mxu0 0.0
    %674 = vmatmul.mubr.f32.gmra.mrb[0].mxu0 %v481
    %v675 = vpop.f32.mrb[0].mxu0
    %v676 = vadd.f32 0.0, %v675
    %v677 = vpop.f32.mrb[0].mxu0
    %v678 = vadd.f32 0.0, %v677
    %679 = vdwg.mxu0
    %680 = vmatprep.subr.mxu0 %v445
    %681 = vmatpush1.msra.mxu0 %v444
    %682 = vmatprep.subr.mxu0 %v451
    %683 = vmatpush1.msra.mxu0 %v450
    %684 = vmatprep.subr.mxu0 %v457
    %685 = vmatpush1.msra.mxu0 %v456
    %686 = vmatprep.subr.mxu0 %v463
    %687 = vmatpush1.msra.mxu0 %v462
    %688 = vmatprep.subr.mxu0 %v500
    %689 = vmatpush1.msra.mxu0 %v497
    %690 = vmatprep.subr.mxu0 0.0
    %691 = vmatpush1.msra.mxu0 0.0
    %692 = vmatprep.subr.mxu0 0.0
    %693 = vmatpush1.msra.mxu0 0.0
    %694 = vmatprep.subr.mxu0 0.0
    %695 = vmatpush1.msra.mxu0 0.0
    %696 = vmatprep.subr.mxu0 0.0
    %697 = vmatpush1.msra.mxu0 0.0
    %698 = vmatprep.subr.mxu0 0.0
    %699 = vmatpush1.msra.mxu0 0.0
    %700 = vmatprep.subr.mxu0 0.0
    %701 = vmatpush1.msra.mxu0 0.0
    %702 = vmatprep.subr.mxu0 0.0
    %703 = vmatpush1.msra.mxu0 0.0
    %704 = vmatprep.subr.mxu0 0.0
    %705 = vmatpush1.msra.mxu0 0.0
    %706 = vmatprep.subr.mxu0 0.0
    %707 = vmatpush1.msra.mxu0 0.0
    %708 = vmatprep.subr.mxu0 0.0
    %709 = vmatpush1.msra.mxu0 0.0
    %710 = vmatprep.subr.mxu0 0.0
    %711 = vmatpush1.msra.mxu0 0.0
    %712 = vmatprep.subr.mxu0 0.0
    %713 = vmatpush1.msra.mxu0 0.0
    %714 = vmatprep.subr.mxu0 0.0
    %715 = vmatpush1.msra.mxu0 0.0
    %716 = vmatprep.subr.mxu0 0.0
    %717 = vmatpush1.msra.mxu0 0.0
    %718 = vmatprep.subr.mxu0 0.0
    %719 = vmatpush1.msra.mxu0 0.0
    %720 = vmatprep.subr.mxu0 0.0
    %721 = vmatpush1.msra.mxu0 0.0
    %722 = vmatprep.subr.mxu0 0.0
    %723 = vmatpush1.msra.mxu0 0.0
    %724 = vmatprep.subr.mxu0 0.0
    %725 = vmatpush1.msra.mxu0 0.0
    %726 = vmatprep.subr.mxu0 0.0
    %727 = vmatpush1.msra.mxu0 0.0
    %728 = vmatprep.subr.mxu0 0.0
    %729 = vmatpush1.msra.mxu0 0.0
    %730 = vmatprep.subr.mxu0 0.0
    %731 = vmatpush1.msra.mxu0 0.0
    %732 = vmatprep.subr.mxu0 0.0
    %733 = vmatpush1.msra.mxu0 0.0
    %734 = vmatprep.subr.mxu0 0.0
    %735 = vmatpush1.msra.mxu0 0.0
    %736 = vmatprep.subr.mxu0 0.0
    %737 = vmatpush1.msra.mxu0 0.0
    %738 = vmatprep.subr.mxu0 0.0
    %739 = vmatpush1.msra.mxu0 0.0
    %740 = vmatprep.subr.mxu0 0.0
    %741 = vmatpush1.msra.mxu0 0.0
    %742 = vmatprep.subr.mxu0 0.0
    %743 = vmatpush1.msra.mxu0 0.0
    %744 = vmatprep.mubr.f32.mxu0 0.0
    %745 = vmatmul.mubr.f32.gmra.mrb[0].mxu0 %v472
    %v746 = vpop.f32.mrb[0].mxu0
    %v747 = vadd.f32 0.0, %v746
    %v748 = vpop.f32.mrb[0].mxu0
    %v749 = vadd.f32 0.0, %v748
    %750 = vmatprep.mubr.f32.mxu0 0.0
    %751 = vmatmul.mubr.f32.gmra.mrb[0].mxu0 %v475
    %v752 = vpop.f32.mrb[0].mxu0
    %v753 = vadd.f32 0.0, %v752
    %v754 = vpop.f32.mrb[0].mxu0
    %v755 = vadd.f32 0.0, %v754
    %756 = vmatprep.mubr.f32.mxu0 0.0
    %757 = vmatmul.mubr.f32.gmra.mrb[0].mxu0 %v478
    %v758 = vpop.f32.mrb[0].mxu0
    %v759 = vadd.f32 0.0, %v758
    %v760 = vpop.f32.mrb[0].mxu0
    %v761 = vadd.f32 0.0, %v760
    %762 = vmatprep.mubr.f32.mxu0 0.0
    %763 = vmatmul.mubr.f32.gmra.mrb[0].mxu0 %v481
    %v764 = vpop.f32.mrb[0].mxu0
    %v765 = vadd.f32 0.0, %v764
    %v766 = vpop.f32.mrb[0].mxu0
    %v767 = vadd.f32 0.0, %v766
    %768 = vdwg.mxu0
    %769 = vst [vmem:[#allocation3] sm:$0xff] %v569
    %770 = vst [vmem:[#allocation3 + $0x8] sm:$0xff] %v571
    %771 = vst [vmem:[#allocation3 + $0x10] sm:$0xff] %v658
    %772 = vst [vmem:[#allocation3 + $0x18] sm:$0xff] %v660
    %773 = vst [vmem:[#allocation3 + $0x20] sm:$0xff] %v747
    %774 = vst [vmem:[#allocation3 + $0x28] sm:$0xff] %v749
    %775 = vst [vmem:[#allocation3 + $0x30] sm:$0xff] %v575
    %776 = vst [vmem:[#allocation3 + $0x38] sm:$0xff] %v577
    %777 = vst [vmem:[#allocation3 + $0x40] sm:$0xff] %v664
    %778 = vst [vmem:[#allocation3 + $0x48] sm:$0xff] %v666
    %779 = vst [vmem:[#allocation3 + $0x50] sm:$0xff] %v753
    %780 = vst [vmem:[#allocation3 + $0x58] sm:$0xff] %v755
    %781 = vst [vmem:[#allocation3 + $0x60] sm:$0xff] %v581
    %782 = vst [vmem:[#allocation3 + $0x68] sm:$0xff] %v583
    %783 = vst [vmem:[#allocation3 + $0x70] sm:$0xff] %v670
    %784 = vst [vmem:[#allocation3 + $0x78] sm:$0xff] %v672
    %785 = vst [vmem:[#allocation3 + $0x80] sm:$0xff] %v759
    %786 = vst [vmem:[#allocation3 + $0x88] sm:$0xff] %v761
    %787 = vst [vmem:[#allocation3 + $0x90] sm:$0xff] %v587
    %788 = vst [vmem:[#allocation3 + $0x98] sm:$0xff] %v589
    %789 = vst [vmem:[#allocation3 + $0xa0] sm:$0xff] %v676
    %790 = vst [vmem:[#allocation3 + $0xa8] sm:$0xff] %v678
    %791 = vst [vmem:[#allocation3 + $0xb0] sm:$0xff] %v765
    %792 = vst [vmem:[#allocation3 + $0xb8] sm:$0xff] %v767
    %v793 = vld [vmem:[#allocation3] sm:$0xff]
    %v794 = vld [vmem:[#allocation3 + $0x8] sm:$0xff]
    %v795 = vld [vmem:[#allocation3 + $0x10] sm:$0xff]
    %v796 = vld [vmem:[#allocation3 + $0x18] sm:$0xff]
    %v797 = vld [vmem:[#allocation3 + $0x20] sm:$0xff]
    %v798 = vld [vmem:[#allocation3 + $0x28] sm:$0xff]
    %v799 = vld [vmem:[#allocation3 + $0x30] sm:$0xff]
    %v800 = vld [vmem:[#allocation3 + $0x38] sm:$0xff]
    %v801 = vld [vmem:[#allocation3 + $0x40] sm:$0xff]
    %v802 = vld [vmem:[#allocation3 + $0x48] sm:$0xff]
    %v803 = vld [vmem:[#allocation3 + $0x50] sm:$0xff]
    %v804 = vld [vmem:[#allocation3 + $0x58] sm:$0xff]
    %v805 = vld [vmem:[#allocation3 + $0x60] sm:$0xff]
    %v806 = vld [vmem:[#allocation3 + $0x68] sm:$0xff]
    %v807 = vld [vmem:[#allocation3 + $0x70] sm:$0xff]
    %v808 = vld [vmem:[#allocation3 + $0x78] sm:$0xff]
    %v809 = vld [vmem:[#allocation3 + $0x80] sm:$0xff]
    %v810 = vld [vmem:[#allocation3 + $0x88] sm:$0xff]
    %v811 = vld [vmem:[#allocation3 + $0x90] sm:$0xff]
    %v812 = vld [vmem:[#allocation3 + $0x98] sm:$0xff]
    %v813 = vld [vmem:[#allocation3 + $0xa0] sm:$0xff]
    %v814 = vld [vmem:[#allocation3 + $0xa8] sm:$0xff]
    %v815 = vld [vmem:[#allocation3 + $0xb0] sm:$0xff]
    %v816 = vld [vmem:[#allocation3 + $0xb8] sm:$0xff]
    %v817 = vld [vmem:[%s2] sm:$0x3f]
    %v819 = vlaneseq
    %v820 = vshrl.u32 %v819, 7
    %v821 = vsub.s32 0, %v820
    %v822 = vrot.slane %v817, %v821
    %v823 = vlaneseq
    %v824 = vshrl.u32 %v823, 7
    %v825 = vsub.s32 1, %v824
    %v826 = vrot.slane %v817, %v825
    %v827 = vlaneseq
    %v828 = vshrl.u32 %v827, 7
    %v829 = vsub.s32 2, %v828
    %v830 = vrot.slane %v817, %v829
    %v831 = vlaneseq
    %v832 = vshrl.u32 %v831, 7
    %v833 = vsub.s32 3, %v832
    %v834 = vrot.slane %v817, %v833
    %v835 = vlaneseq
    %v836 = vshrl.u32 %v835, 7
    %v837 = vsub.s32 4, %v836
    %v838 = vrot.slane %v817, %v837
    %v839 = vlaneseq
    %v840 = vshrl.u32 %v839, 7
    %v841 = vsub.s32 5, %v840
    %v842 = vrot.slane %v817, %v841
    %v849 = vmul.f32 %v793, %v822
    %v850 = vmul.f32 %v794, %v826
    %v851 = vmul.f32 %v795, %v830
    %v852 = vmul.f32 %v796, %v834
    %v853 = vmul.f32 %v797, %v838
    %v854 = vmul.f32 %v798, %v842
    %v855 = vmul.f32 %v799, %v822
    %v856 = vmul.f32 %v800, %v826
    %v857 = vmul.f32 %v801, %v830
    %v858 = vmul.f32 %v802, %v834
    %v859 = vmul.f32 %v803, %v838
    %v860 = vmul.f32 %v804, %v842
    %v861 = vmul.f32 %v805, %v822
    %v862 = vmul.f32 %v806, %v826
    %v863 = vmul.f32 %v807, %v830
    %v864 = vmul.f32 %v808, %v834
    %v865 = vmul.f32 %v809, %v838
    %v866 = vmul.f32 %v810, %v842
    %v867 = vmul.f32 %v811, %v822
    %v868 = vmul.f32 %v812, %v826
    %v869 = vmul.f32 %v813, %v830
    %v870 = vmul.f32 %v814, %v834
    %v871 = vmul.f32 %v815, %v838
    %v872 = vmul.f32 %v816, %v842
    %v873 = vmul.f32 %v849, %v849
    %v874 = vmul.f32 %v850, %v850
    %v875 = vmul.f32 %v851, %v851
    %v876 = vmul.f32 %v852, %v852
    %v877 = vmul.f32 %v853, %v853
    %v878 = vmul.f32 %v854, %v854
    %v879 = vmul.f32 %v855, %v855
    %v880 = vmul.f32 %v856, %v856
    %v881 = vmul.f32 %v857, %v857
    %v882 = vmul.f32 %v858, %v858
    %v883 = vmul.f32 %v859, %v859
    %v884 = vmul.f32 %v860, %v860
    %v885 = vmul.f32 %v861, %v861
    %v886 = vmul.f32 %v862, %v862
    %v887 = vmul.f32 %v863, %v863
    %v888 = vmul.f32 %v864, %v864
    %v889 = vmul.f32 %v865, %v865
    %v890 = vmul.f32 %v866, %v866
    %v891 = vmul.f32 %v867, %v867
    %v892 = vmul.f32 %v868, %v868
    %v893 = vmul.f32 %v869, %v869
    %v894 = vmul.f32 %v870, %v870
    %v895 = vmul.f32 %v871, %v871
    %v896 = vmul.f32 %v872, %v872
    %v897 = vadd.f32 %v849, %v850
    %v898 = vadd.f32 %v897, %v851
    %899 = vadd.xlane.f32.xlu0 %v898
    %v900 = vpop.xlane.xlu0 %899
    %v901 = vadd.f32 %v855, %v856
    %v902 = vadd.f32 %v901, %v857
    %903 = vadd.xlane.f32.xlu0 %v902
    %v904 = vpop.xlane.xlu0 %903
    %v905 = vadd.f32 %v861, %v862
    %v906 = vadd.f32 %v905, %v863
    %907 = vadd.xlane.f32.xlu0 %v906
    %v908 = vpop.xlane.xlu0 %907
    %v909 = vadd.f32 %v867, %v868
    %v910 = vadd.f32 %v909, %v869
    %911 = vadd.xlane.f32.xlu0 %v910
    %v912 = vpop.xlane.xlu0 %911
    %v913 = vadd.f32 %v873, %v874
    %v914 = vadd.f32 %v913, %v875
    %915 = vadd.xlane.f32.xlu0 %v914
    %v916 = vpop.xlane.xlu0 %915
    %v917 = vadd.f32 %v879, %v880
    %v918 = vadd.f32 %v917, %v881
    %919 = vadd.xlane.f32.xlu0 %v918
    %v920 = vpop.xlane.xlu0 %919
    %v921 = vadd.f32 %v885, %v886
    %v922 = vadd.f32 %v921, %v887
    %923 = vadd.xlane.f32.xlu0 %v922
    %v924 = vpop.xlane.xlu0 %923
    %v925 = vadd.f32 %v891, %v892
    %v926 = vadd.f32 %v925, %v893
    %927 = vadd.xlane.f32.xlu0 %v926
    %v928 = vpop.xlane.xlu0 %927
    %v929 = vadd.f32 %v900, %v904
    %v930 = vadd.f32 %v929, %v908
    %v931 = vadd.f32 %v930, %v912
    %v932 = vadd.f32 %v916, %v920
    %v933 = vadd.f32 %v932, %v924
    %v934 = vadd.f32 %v933, %v928
    %v935 = vmul.f32 %v931, 0.0009765625
    %v936 = vmul.f32 %v934, 0.0009765625
    %v937 = vmul.f32 %v935, %v935
    %v938 = vsub.f32 %v936, %v937
    %v939 = vmax.f32 %v938, 0.0
    %v940 = vadd.f32 %v939, 1e-05
    %v941 = vrsqrt.pop %v940
    %v942 = vld [vmem:[#allocation3] sm:$0xff]
    %v943 = vld [vmem:[#allocation3 + $0x8] sm:$0xff]
    %v944 = vld [vmem:[#allocation3 + $0x10] sm:$0xff]
    %v945 = vsub.f32 %v942, %v935
    %v946 = vsub.f32 %v943, %v935
    %v947 = vsub.f32 %v944, %v935
    %v948 = vmul.f32 %v945, %v941
    %v949 = vmul.f32 %v946, %v941
    %v950 = vmul.f32 %v947, %v941
    %v951 = vmax.f32 %v948, 0.0
    %v952 = vmax.f32 %v949, 0.0
    %v953 = vmax.f32 %v950, 0.0
    %954 = vst [vmem:[#allocation9] sm:$0xff] %v951
    %955 = vst [vmem:[#allocation9 + $0x8] sm:$0xff] %v952
    %956 = vst [vmem:[#allocation9 + $0x10] sm:$0xff] %v953
    %v957 = vld [vmem:[#allocation3 + $0x30] sm:$0xff]
    %v958 = vld [vmem:[#allocation3 + $0x38] sm:$0xff]
    %v959 = vld [vmem:[#allocation3 + $0x40] sm:$0xff]
    %v960 = vsub.f32 %v957, %v935
    %v961 = vsub.f32 %v958, %v935
    %v962 = vsub.f32 %v959, %v935
    %v963 = vmul.f32 %v960, %v941
    %v964 = vmul.f32 %v961, %v941
    %v965 = vmul.f32 %v962, %v941
    %v966 = vmax.f32 %v963, 0.0
    %v967 = vmax.f32 %v964, 0.0
    %v968 = vmax.f32 %v965, 0.0
    %969 = vst [vmem:[#allocation9 + $0x18] sm:$0xff] %v966
    %970 = vst [vmem:[#allocation9 + $0x20] sm:$0xff] %v967
    %971 = vst [vmem:[#allocation9 + $0x28] sm:$0xff] %v968
    %v972 = vld [vmem:[#allocation3 + $0x60] sm:$0xff]
    %v973 = vld [vmem:[#allocation3 + $0x68] sm:$0xff]
    %v974 = vld [vmem:[#allocation3 + $0x70] sm:$0xff]
    %v975 = vsub.f32 %v972, %v935
    %v976 = vsub.f32 %v973, %v935
    %v977 = vsub.f32 %v974, %v935
    %v978 = vmul.f32 %v975, %v941
    %v979 = vmul.f32 %v976, %v941
    %v980 = vmul.f32 %v977, %v941
    %v981 = vmax.f32 %v978, 0.0
    %v982 = vmax.f32 %v979, 0.0
    %v983 = vmax.f32 %v980, 0.0
    %984 = vst [vmem:[#allocation9 + $0x30] sm:$0xff] %v981
    %985 = vst [vmem:[#allocation9 + $0x38] sm:$0xff] %v982
    %986 = vst [vmem:[#allocation9 + $0x40] sm:$0xff] %v983
    %v987 = vld [vmem:[#allocation3 + $0x90] sm:$0xff]
    %v988 = vld [vmem:[#allocation3 + $0x98] sm:$0xff]
    %v989 = vld [vmem:[#allocation3 + $0xa0] sm:$0xff]
    %v990 = vsub.f32 %v987, %v935
    %v991 = vsub.f32 %v988, %v935
    %v992 = vsub.f32 %v989, %v935
    %v993 = vmul.f32 %v990, %v941
    %v994 = vmul.f32 %v991, %v941
    %v995 = vmul.f32 %v992, %v941
    %v996 = vmax.f32 %v993, 0.0
    %v997 = vmax.f32 %v994, 0.0
    %v998 = vmax.f32 %v995, 0.0
    %999 = vst [vmem:[#allocation9 + $0x48] sm:$0xff] %v996
    %1000 = vst [vmem:[#allocation9 + $0x50] sm:$0xff] %v997
    %1001 = vst [vmem:[#allocation9 + $0x58] sm:$0xff] %v998
    %v1002 = vadd.f32 %v852, %v853
    %v1003 = vadd.f32 %v1002, %v854
    %1004 = vadd.xlane.f32.xlu0 %v1003
    %v1005 = vpop.xlane.xlu0 %1004
    %v1006 = vadd.f32 %v858, %v859
    %v1007 = vadd.f32 %v1006, %v860
    %1008 = vadd.xlane.f32.xlu0 %v1007
    %v1009 = vpop.xlane.xlu0 %1008
    %v1010 = vadd.f32 %v864, %v865
    %v1011 = vadd.f32 %v1010, %v866
    %1012 = vadd.xlane.f32.xlu0 %v1011
    %v1013 = vpop.xlane.xlu0 %1012
    %v1014 = vadd.f32 %v870, %v871
    %v1015 = vadd.f32 %v1014, %v872
    %1016 = vadd.xlane.f32.xlu0 %v1015
    %v1017 = vpop.xlane.xlu0 %1016
    %v1018 = vadd.f32 %v876, %v877
    %v1019 = vadd.f32 %v1018, %v878
    %1020 = vadd.xlane.f32.xlu0 %v1019
    %v1021 = vpop.xlane.xlu0 %1020
    %v1022 = vadd.f32 %v882, %v883
    %v1023 = vadd.f32 %v1022, %v884
    %1024 = vadd.xlane.f32.xlu0 %v1023
    %v1025 = vpop.xlane.xlu0 %1024
    %v1026 = vadd.f32 %v888, %v889
    %v1027 = vadd.f32 %v1026, %v890
    %1028 = vadd.xlane.f32.xlu0 %v1027
    %v1029 = vpop.xlane.xlu0 %1028
    %v1030 = vadd.f32 %v894, %v895
    %v1031 = vadd.f32 %v1030, %v896
    %1032 = vadd.xlane.f32.xlu0 %v1031
    %v1033 = vpop.xlane.xlu0 %1032
    %v1034 = vadd.f32 %v1005, %v1009
    %v1035 = vadd.f32 %v1034, %v1013
    %v1036 = vadd.f32 %v1035, %v1017
    %v1037 = vadd.f32 %v1021, %v1025
    %v1038 = vadd.f32 %v1037, %v1029
    %v1039 = vadd.f32 %v1038, %v1033
    %v1040 = vmul.f32 %v1036, 0.0009765625
    %v1041 = vmul.f32 %v1039, 0.0009765625
    %v1042 = vmul.f32 %v1040, %v1040
    %v1043 = vsub.f32 %v1041, %v1042
    %v1044 = vmax.f32 %v1043, 0.0
    %v1045 = vadd.f32 %v1044, 1e-05
    %v1046 = vrsqrt.pop %v1045
    %v1047 = vld [vmem:[#allocation3 + $0x18] sm:$0xff]
    %v1048 = vld [vmem:[#allocation3 + $0x20] sm:$0xff]
    %v1049 = vld [vmem:[#allocation3 + $0x28] sm:$0xff]
    %v1050 = vsub.f32 %v1047, %v1040
    %v1051 = vsub.f32 %v1048, %v1040
    %v1052 = vsub.f32 %v1049, %v1040
    %v1053 = vmul.f32 %v1050, %v1046
    %v1054 = vmul.f32 %v1051, %v1046
    %v1055 = vmul.f32 %v1052, %v1046
    %v1056 = vmax.f32 %v1053, 0.0
    %v1057 = vmax.f32 %v1054, 0.0
    %v1058 = vmax.f32 %v1055, 0.0
    %s1059 = scalar_lea.vmem [#allocation9], 96
    %1060 = vst [vmem:[%s1059] sm:$0xff] %v1056
    %1061 = vst [vmem:[%s1059 + $0x8] sm:$0xff] %v1057
    %1062 = vst [vmem:[%s1059 + $0x10] sm:$0xff] %v1058
    %v1063 = vld [vmem:[#allocation3 + $0x48] sm:$0xff]
    %v1064 = vld [vmem:[#allocation3 + $0x50] sm:$0xff]
    %v1065 = vld [vmem:[#allocation3 + $0x58] sm:$0xff]
    %v1066 = vsub.f32 %v1063, %v1040
    %v1067 = vsub.f32 %v1064, %v1040
    %v1068 = vsub.f32 %v1065, %v1040
    %v1069 = vmul.f32 %v1066, %v1046
    %v1070 = vmul.f32 %v1067, %v1046
    %v1071 = vmul.f32 %v1068, %v1046
    %v1072 = vmax.f32 %v1069, 0.0
    %v1073 = vmax.f32 %v1070, 0.0
    %v1074 = vmax.f32 %v1071, 0.0
    %1075 = vst [vmem:[%s1059 + $0x18] sm:$0xff] %v1072
    %1076 = vst [vmem:[%s1059 + $0x20] sm:$0xff] %v1073
    %1077 = vst [vmem:[%s1059 + $0x28] sm:$0xff] %v1074
    %v1078 = vld [vmem:[#allocation3 + $0x78] sm:$0xff]
    %v1079 = vld [vmem:[#allocation3 + $0x80] sm:$0xff]
    %v1080 = vld [vmem:[#allocation3 + $0x88] sm:$0xff]
    %v1081 = vsub.f32 %v1078, %v1040
    %v1082 = vsub.f32 %v1079, %v1040
    %v1083 = vsub.f32 %v1080, %v1040
    %v1084 = vmul.f32 %v1081, %v1046
    %v1085 = vmul.f32 %v1082, %v1046
    %v1086 = vmul.f32 %v1083, %v1046
    %v1087 = vmax.f32 %v1084, 0.0
    %v1088 = vmax.f32 %v1085, 0.0
    %v1089 = vmax.f32 %v1086, 0.0
    %1090 = vst [vmem:[%s1059 + $0x30] sm:$0xff] %v1087
    %1091 = vst [vmem:[%s1059 + $0x38] sm:$0xff] %v1088
    %1092 = vst [vmem:[%s1059 + $0x40] sm:$0xff] %v1089
    %v1093 = vld [vmem:[#allocation3 + $0xa8] sm:$0xff]
    %v1094 = vld [vmem:[#allocation3 + $0xb0] sm:$0xff]
    %v1095 = vld [vmem:[#allocation3 + $0xb8] sm:$0xff]
    %v1096 = vsub.f32 %v1093, %v1040
    %v1097 = vsub.f32 %v1094, %v1040
    %v1098 = vsub.f32 %v1095, %v1040
    %v1099 = vmul.f32 %v1096, %v1046
    %v1100 = vmul.f32 %v1097, %v1046
    %v1101 = vmul.f32 %v1098, %v1046
    %v1102 = vmax.f32 %v1099, 0.0
    %v1103 = vmax.f32 %v1100, 0.0
    %v1104 = vmax.f32 %v1101, 0.0
    %1105 = vst [vmem:[%s1059 + $0x48] sm:$0xff] %v1102
    %1106 = vst [vmem:[%s1059 + $0x50] sm:$0xff] %v1103
    %1107 = vst [vmem:[%s1059 + $0x58] sm:$0xff] %v1104
    // Predicated region
    $region22: #{tpu_custom_call.1} parent=1 // pred_check
      _
    $region23: #{tpu_custom_call.1} parent=1 // pred_check_branch
      %1109 = sbr.rel (0) target = $region25
    $region24: #{tpu_custom_call.1} parent=1 // pred_region
      %s1111 = ssub.s32 3072, 3072
      %1112 = vsyncadd [#allocation6], %s1111
      %s1113 = sshll.u32 [#allocation9], 4
      %s1114 = int_to_ptr.vmem [resolvable:$true] %s1113
      %1119 = dma.vmem_to_hbm [thread:$0]  %s1114, 3072, %s3, [#allocation6], 384, 384, 24
    $region25: #{tpu_custom_call.1} parent=1 // pred_fallthru
      _
    // Predicated region
    $region26: #{tpu_custom_call.1} parent=1 // pred_check
      _
    $region27: #{tpu_custom_call.1} parent=1 // pred_check_branch
      %1121 = sbr.rel (0) target = $region29
    $region28: #{tpu_custom_call.1} parent=1 // pred_region
      %1122 = dma.done [#allocation6], 3072
    $region29: #{tpu_custom_call.1} parent=1 // pred_fallthru
      _
    %1123 = vsyncpa [#allocation5], 1
    %1124 = vsyncpa [#allocation8], 1
    %1125 = vsyncpa [#allocation6], 1

</llo_original>
